<compile_context>
chip_gen: v5e
topology: v5e:2x2
jax: 0.10.0
libtpu: 0.0.40
codegen_flags: <defaults>
</compile_context>

<pallas_src>
import jax
import jax.numpy as jnp
from jax.experimental import pallas as pl
from jax.experimental.pallas import tpu as pltpu

PROJ_EPS = 1e-5      # ball projection margin (standard Ganea et al. constant)
EPS = 1e-15          # norm clamp
MAX_TANH_ARG = 15.0
LN_EPS = 1e-5        # nn.LayerNorm default eps


# ---------------- hyperbolic helper math (shared by kernel & pure-JAX reference) -----

def _rcp(x, approx):
    # approx=True only valid inside a Pallas kernel (EUP vrcp); reference uses exact.
    if approx:
        return pl.reciprocal(x, approx=True)
    return 1.0 / x


def _row_norm(x):
    return jnp.sqrt(jnp.sum(x * x, axis=-1, keepdims=True))


def _project(x, approx):
    # clip each row back inside the unit ball (radius 1 - PROJ_EPS)
    n = _row_norm(x)
    maxn = 1.0 - PROJ_EPS
    scale = jnp.where(n > maxn, maxn * _rcp(jnp.maximum(n, EPS), approx), 1.0)
    return x * scale


def _atanh(x):
    x = jnp.clip(x, 0.0, 1.0 - 1e-7)
    return 0.5 * jnp.log((1.0 + x) / (1.0 - x))


def _tanh(x):
    return jnp.tanh(jnp.clip(x, -MAX_TANH_ARG, MAX_TANH_ARG))


def _point_stats(p_raw, approx):
    """Project a hyperbolic point once and return (p_proj, atanh(||p||)/||p||)."""
    p = _project(p_raw, approx)
    n = jnp.maximum(_row_norm(p), EPS)
    alpha = _atanh(n) * _rcp(n, approx)
    return p, alpha


def _expmap0_dir(m, alpha, approx):
    """tanh(||m|| * alpha) * m / ||m||, projected.  Shared tail of mob_mat_mul /
    mob_pointwise_prod once the input-point stats (alpha) have been hoisted."""
    mn = jnp.maximum(_row_norm(m), EPS)
    res = _tanh(mn * alpha) * m * _rcp(mn, approx)
    return _project(res, approx)


def mob_add(u, v, approx):
    dot = jnp.sum(u * v, axis=-1, keepdims=True)
    nu2 = jnp.sum(u * u, axis=-1, keepdims=True)
    nv2 = jnp.sum(v * v, axis=-1, keepdims=True)
    num = (1.0 + 2.0 * dot + nv2) * u + (1.0 - nu2) * v
    den = 1.0 + 2.0 * dot + nu2 * nv2
    return _project(num * _rcp(jnp.maximum(den, EPS), approx), approx)


def log_map_zero(y, approx):
    y = _project(y, approx)
    n = jnp.maximum(_row_norm(y), EPS)
    return (_atanh(n) * _rcp(n, approx)) * y


def layer_norm(x, g, b):
    mean = jnp.mean(x, axis=-1, keepdims=True)
    var = jnp.mean((x - mean) ** 2, axis=-1, keepdims=True)
    return (x - mean) * jax.lax.rsqrt(var + LN_EPS) * g + b


def _mobius_gru_forward(x, h, w_cat, u_cat, w_h, vec, *, approx):
    """Forward of the GRU cell (neg_direc=False path, layernorm[1][0]/[1][1]).

    w_cat = [w_z | w_r] : [H, 2H],  u_cat = [u_z | u_r] : [IN, 2H],  w_h : [H, H]
    vec rows: 0=b_z 1=b_r 2=b_h 3=ln_g_z 4=ln_b_z 5=ln_g_r 6=ln_b_r (7=pad)
    """
    H = h.shape[-1]
    b_z, b_r, b_h = vec[0:1, :], vec[1:2, :], vec[2:3, :]
    ln_g_z, ln_b_z = vec[3:4, :], vec[4:5, :]
    ln_g_r, ln_b_r = vec[5:6, :], vec[6:7, :]

    # hoisted per-point stats: each of x, h projected + reduced + atanh'd exactly once
    x_p, alpha_x = _point_stats(x, approx)
    h_p, alpha_h = _point_stats(h, approx)

    # fused gate matmuls (one MXU push each instead of two)
    mh = jnp.dot(h_p, w_cat, preferred_element_type=jnp.float32)   # [B, 2H]
    mx = jnp.dot(x_p, u_cat, preferred_element_type=jnp.float32)   # [B, 2H]

    wz_h = _expmap0_dir(mh[:, :H], alpha_h, approx)
    wr_h = _expmap0_dir(mh[:, H:], alpha_h, approx)
    uz_x = _expmap0_dir(mx[:, :H], alpha_x, approx)
    ur_x = _expmap0_dir(mx[:, H:], alpha_x, approx)   # reused below (module uses u_r twice)

    # z gate
    z_hyp = mob_add(mob_add(wz_h, uz_x, approx), b_z, approx)
    z = jax.nn.sigmoid(layer_norm(log_map_zero(z_hyp, approx), ln_g_z, ln_b_z))

    # r gate
    r_hyp = mob_add(mob_add(wr_h, ur_x, approx), b_r, approx)
    r = jax.nn.sigmoid(layer_norm(log_map_zero(r_hyp, approx), ln_g_r, ln_b_r))

    # r (.) h   (Mobius pointwise product; h stats already hoisted)
    r_point_h = _expmap0_dir(h_p * r, alpha_h, approx)

    # h_tilde = (w_h (x) r_point_h)  (+)  (u_r (x) x)  (+)  b_h
    # NOTE: the reference module uses u_r (not u_h) here; ur_x is reused (CSE).
    rph_p, alpha_rph = _point_stats(r_point_h, approx)
    wh_rph = _expmap0_dir(
        jnp.dot(rph_p, w_h, preferred_element_type=jnp.float32), alpha_rph, approx)
    h_tilde = mob_add(mob_add(wh_rph, ur_x, approx), b_h, approx)

    # new_h = h (+) ((-h (+) h_tilde) (.) z)
    mhoh = mob_add(-h, h_tilde, approx)
    mhoh_p, alpha_m = _point_stats(mhoh, approx)
    delta = _expmap0_dir(mhoh_p * z, alpha_m, approx)
    return mob_add(h, delta, approx)


# ---------------- Pallas kernel ----------------

def mobius_gru_kernel(x_ref, h_ref, wcat_ref, ucat_ref, wh_ref, vec_ref, out_ref):
    out_ref[...] = _mobius_gru_forward(
        x_ref[...], h_ref[...],
        wcat_ref[...], ucat_ref[...], wh_ref[...],
        vec_ref[...], approx=True,
    ).astype(out_ref.dtype)


def mobius_gru_cell(x, h, w_cat, u_cat, w_h, vec):
    """x: [B, IN], h: [B, H], w_cat: [H, 2H], u_cat: [IN, 2H], w_h: [H, H],
    vec: [8, H] packed (b_z, b_r, b_h, ln_g_z, ln_b_z, ln_g_r, ln_b_r, pad)."""
    B, H = h.shape
    vmem = pl.BlockSpec(memory_space=pltpu.MemorySpace.VMEM)
    return pl.pallas_call(
        mobius_gru_kernel,
        out_shape=jax.ShapeDtypeStruct((B, H), jnp.float32),
        in_specs=[vmem] * 6,
        out_specs=vmem,
    )(x, h, w_cat, u_cat, w_h, vec)


# ---------------- driver ----------------

if __name__ == "__main__":
    B, IN, HID = 8, 32, 32
    key = jax.random.PRNGKey(0)
    ks = jax.random.split(key, 8)
    kinit = (1.0 / HID) ** 0.5

    # deterministic parameter init mirroring the module's __init__
    w_z = jax.random.uniform(ks[0], (HID, HID), jnp.float32, -kinit, kinit)
    w_r = jax.random.uniform(ks[1], (HID, HID), jnp.float32, -kinit, kinit)
    w_h = jax.random.uniform(ks[2], (HID, HID), jnp.float32, -kinit, kinit)
    u_z = jax.random.uniform(ks[3], (IN, HID), jnp.float32, -kinit, kinit)
    u_r = jax.random.uniform(ks[4], (IN, HID), jnp.float32, -kinit, kinit)
    u_h = jax.random.uniform(ks[5], (IN, HID), jnp.float32, -kinit, kinit)  # unused by fwd
    b_z = jnp.zeros((1, HID), jnp.float32)
    b_r = jnp.zeros((1, HID), jnp.float32)
    b_h = jnp.zeros((1, HID), jnp.float32)
    ln_g_z = jnp.ones((1, HID), jnp.float32)   # layernorm[1][0].weight
    ln_b_z = jnp.zeros((1, HID), jnp.float32)  # layernorm[1][0].bias
    ln_g_r = jnp.ones((1, HID), jnp.float32)   # layernorm[1][1].weight
    ln_b_r = jnp.zeros((1, HID), jnp.float32)  # layernorm[1][1].bias

    # packed / fused parameters passed to the kernel (u_h intentionally dropped:
    # the reference forward never uses it)
    w_cat = jnp.concatenate([w_z, w_r], axis=1)        # [H, 2H]
    u_cat = jnp.concatenate([u_z, u_r], axis=1)        # [IN, 2H]
    vec = jnp.concatenate(
        [b_z, b_r, b_h, ln_g_z, ln_b_z, ln_g_r, ln_b_r,
         jnp.zeros((1, HID), jnp.float32)], axis=0)    # [8, H]

    # inputs are points on the Poincare ball: small-norm vectors
    hyp_x = 0.05 * jax.random.normal(ks[6], (B, IN), jnp.float32)
    hidden = 0.05 * jax.random.normal(ks[7], (B, HID), jnp.float32)

    out = mobius_gru_cell(hyp_x, hidden, w_cat, u_cat, w_h, vec)
    out = jax.block_until_ready(out)

    # sanity check against the pure-JAX reference of the same math (exact divides);
    # tolerance relaxed to account for the in-kernel approx reciprocals.
    ref = _mobius_gru_forward(hyp_x, hidden, w_cat, u_cat, w_h, vec, approx=False)
    assert out.shape == (B, HID)
    assert bool(jnp.all(jnp.isfinite(out)))
    assert bool(jnp.allclose(out, ref, atol=2e-3, rtol=2e-2))

    print("KERNEL_OK")
</pallas_src>

<mosaic_0001>
module attributes {stable_mosaic.version = 11 : i64} {
  func.func @mobius_gru_kernel(%arg0: memref<8x32xf32, #tpu.memory_space<vmem>>, %arg1: memref<8x32xf32, #tpu.memory_space<vmem>>, %arg2: memref<32x64xf32, #tpu.memory_space<vmem>>, %arg3: memref<32x64xf32, #tpu.memory_space<vmem>>, %arg4: memref<32x32xf32, #tpu.memory_space<vmem>>, %arg5: memref<8x32xf32, #tpu.memory_space<vmem>>, %arg6: memref<8x32xf32, #tpu.memory_space<vmem>>) attributes {dimension_semantics = [], scalar_prefetch = 0 : i64, scratch_operands = 0 : i64, tpu.core_type = #tpu.core_type<tc>} {
    %c0 = arith.constant 0 : index
    %c0_0 = arith.constant 0 : index
    %0 = vector.load %arg0[%c0, %c0_0] : memref<8x32xf32, #tpu.memory_space<vmem>>, vector<8x32xf32>
    %c0_1 = arith.constant 0 : index
    %c0_2 = arith.constant 0 : index
    %1 = vector.load %arg1[%c0_1, %c0_2] : memref<8x32xf32, #tpu.memory_space<vmem>>, vector<8x32xf32>
    %c0_3 = arith.constant 0 : index
    %c0_4 = arith.constant 0 : index
    %2 = vector.load %arg2[%c0_3, %c0_4] : memref<32x64xf32, #tpu.memory_space<vmem>>, vector<32x64xf32>
    %c0_5 = arith.constant 0 : index
    %c0_6 = arith.constant 0 : index
    %3 = vector.load %arg3[%c0_5, %c0_6] : memref<32x64xf32, #tpu.memory_space<vmem>>, vector<32x64xf32>
    %c0_7 = arith.constant 0 : index
    %c0_8 = arith.constant 0 : index
    %4 = vector.load %arg4[%c0_7, %c0_8] : memref<32x32xf32, #tpu.memory_space<vmem>>, vector<32x32xf32>
    %c0_9 = arith.constant 0 : index
    %c0_10 = arith.constant 0 : index
    %5 = vector.load %arg5[%c0_9, %c0_10] : memref<8x32xf32, #tpu.memory_space<vmem>>, vector<8x32xf32>
    %6 = vector.extract_strided_slice %5 {offsets = [0, 0], sizes = [1, 32], strides = [1, 1]} : vector<8x32xf32> to vector<1x32xf32>
    %7 = vector.extract_strided_slice %5 {offsets = [1, 0], sizes = [1, 32], strides = [1, 1]} : vector<8x32xf32> to vector<1x32xf32>
    %8 = vector.extract_strided_slice %5 {offsets = [2, 0], sizes = [1, 32], strides = [1, 1]} : vector<8x32xf32> to vector<1x32xf32>
    %9 = vector.extract_strided_slice %5 {offsets = [3, 0], sizes = [1, 32], strides = [1, 1]} : vector<8x32xf32> to vector<1x32xf32>
    %10 = vector.extract_strided_slice %5 {offsets = [4, 0], sizes = [1, 32], strides = [1, 1]} : vector<8x32xf32> to vector<1x32xf32>
    %11 = vector.extract_strided_slice %5 {offsets = [5, 0], sizes = [1, 32], strides = [1, 1]} : vector<8x32xf32> to vector<1x32xf32>
    %12 = vector.extract_strided_slice %5 {offsets = [6, 0], sizes = [1, 32], strides = [1, 1]} : vector<8x32xf32> to vector<1x32xf32>
    %13 = arith.mulf %0, %0 : vector<8x32xf32>
    %cst = arith.constant dense<0.000000e+00> : vector<8xf32>
    %14 = vector.multi_reduction <add>, %13, %cst [1] : vector<8x32xf32> to vector<8xf32>
    %15 = vector.shape_cast %14 : vector<8xf32> to vector<8x1xf32>
    %16 = math.sqrt %15 : vector<8x1xf32>
    %cst_11 = arith.constant 0.999989986 : f32
    %17 = vector.broadcast %cst_11 : f32 to vector<8x1xf32>
    %18 = arith.cmpf ogt, %16, %17 : vector<8x1xf32>
    %cst_12 = arith.constant 1.000000e-15 : f32
    %19 = vector.broadcast %cst_12 : f32 to vector<8x1xf32>
    %20 = arith.maximumf %16, %19 : vector<8x1xf32>
    %21 = tpu.reciprocal %20 {approx = true} : vector<8x1xf32> -> vector<8x1xf32>
    %cst_13 = arith.constant 0.999989986 : f32
    %22 = vector.broadcast %cst_13 : f32 to vector<8x1xf32>
    %23 = arith.mulf %22, %21 : vector<8x1xf32>
    %cst_14 = arith.constant 1.000000e+00 : f32
    %24 = vector.broadcast %cst_14 : f32 to vector<8x1xf32>
    %25 = arith.select %18, %23, %24 : vector<8x1xi1>, vector<8x1xf32>
    %26 = vector.broadcast %25 : vector<8x1xf32> to vector<8x32xf32>
    %27 = arith.mulf %0, %26 : vector<8x32xf32>
    %28 = arith.mulf %27, %27 : vector<8x32xf32>
    %cst_15 = arith.constant dense<0.000000e+00> : vector<8xf32>
    %29 = vector.multi_reduction <add>, %28, %cst_15 [1] : vector<8x32xf32> to vector<8xf32>
    %30 = vector.shape_cast %29 : vector<8xf32> to vector<8x1xf32>
    %31 = math.sqrt %30 : vector<8x1xf32>
    %cst_16 = arith.constant 1.000000e-15 : f32
    %32 = vector.broadcast %cst_16 : f32 to vector<8x1xf32>
    %33 = arith.maximumf %31, %32 : vector<8x1xf32>
    %cst_17 = arith.constant 0.000000e+00 : f32
    %cst_18 = arith.constant 0.99999988 : f32
    %34 = vector.broadcast %cst_17 : f32 to vector<8x1xf32>
    %35 = arith.maximumf %34, %33 : vector<8x1xf32>
    %36 = vector.broadcast %cst_18 : f32 to vector<8x1xf32>
    %37 = arith.minimumf %36, %35 : vector<8x1xf32>
    %cst_19 = arith.constant 1.000000e+00 : f32
    %38 = vector.broadcast %cst_19 : f32 to vector<8x1xf32>
    %39 = arith.addf %38, %37 : vector<8x1xf32>
    %cst_20 = arith.constant 1.000000e+00 : f32
    %40 = vector.broadcast %cst_20 : f32 to vector<8x1xf32>
    %41 = arith.subf %40, %37 : vector<8x1xf32>
    %42 = arith.divf %39, %41 : vector<8x1xf32>
    %43 = math.log %42 : vector<8x1xf32>
    %cst_21 = arith.constant 5.000000e-01 : f32
    %44 = vector.broadcast %cst_21 : f32 to vector<8x1xf32>
    %45 = arith.mulf %44, %43 : vector<8x1xf32>
    %46 = tpu.reciprocal %33 {approx = true} : vector<8x1xf32> -> vector<8x1xf32>
    %47 = arith.mulf %45, %46 : vector<8x1xf32>
    %48 = arith.mulf %1, %1 : vector<8x32xf32>
    %cst_22 = arith.constant dense<0.000000e+00> : vector<8xf32>
    %49 = vector.multi_reduction <add>, %48, %cst_22 [1] : vector<8x32xf32> to vector<8xf32>
    %50 = vector.shape_cast %49 : vector<8xf32> to vector<8x1xf32>
    %51 = math.sqrt %50 : vector<8x1xf32>
    %cst_23 = arith.constant 0.999989986 : f32
    %52 = vector.broadcast %cst_23 : f32 to vector<8x1xf32>
    %53 = arith.cmpf ogt, %51, %52 : vector<8x1xf32>
    %cst_24 = arith.constant 1.000000e-15 : f32
    %54 = vector.broadcast %cst_24 : f32 to vector<8x1xf32>
    %55 = arith.maximumf %51, %54 : vector<8x1xf32>
    %56 = tpu.reciprocal %55 {approx = true} : vector<8x1xf32> -> vector<8x1xf32>
    %cst_25 = arith.constant 0.999989986 : f32
    %57 = vector.broadcast %cst_25 : f32 to vector<8x1xf32>
    %58 = arith.mulf %57, %56 : vector<8x1xf32>
    %cst_26 = arith.constant 1.000000e+00 : f32
    %59 = vector.broadcast %cst_26 : f32 to vector<8x1xf32>
    %60 = arith.select %53, %58, %59 : vector<8x1xi1>, vector<8x1xf32>
    %61 = vector.broadcast %60 : vector<8x1xf32> to vector<8x32xf32>
    %62 = arith.mulf %1, %61 : vector<8x32xf32>
    %63 = arith.mulf %62, %62 : vector<8x32xf32>
    %cst_27 = arith.constant dense<0.000000e+00> : vector<8xf32>
    %64 = vector.multi_reduction <add>, %63, %cst_27 [1] : vector<8x32xf32> to vector<8xf32>
    %65 = vector.shape_cast %64 : vector<8xf32> to vector<8x1xf32>
    %66 = math.sqrt %65 : vector<8x1xf32>
    %cst_28 = arith.constant 1.000000e-15 : f32
    %67 = vector.broadcast %cst_28 : f32 to vector<8x1xf32>
    %68 = arith.maximumf %66, %67 : vector<8x1xf32>
    %cst_29 = arith.constant 0.000000e+00 : f32
    %cst_30 = arith.constant 0.99999988 : f32
    %69 = vector.broadcast %cst_29 : f32 to vector<8x1xf32>
    %70 = arith.maximumf %69, %68 : vector<8x1xf32>
    %71 = vector.broadcast %cst_30 : f32 to vector<8x1xf32>
    %72 = arith.minimumf %71, %70 : vector<8x1xf32>
    %cst_31 = arith.constant 1.000000e+00 : f32
    %73 = vector.broadcast %cst_31 : f32 to vector<8x1xf32>
    %74 = arith.addf %73, %72 : vector<8x1xf32>
    %cst_32 = arith.constant 1.000000e+00 : f32
    %75 = vector.broadcast %cst_32 : f32 to vector<8x1xf32>
    %76 = arith.subf %75, %72 : vector<8x1xf32>
    %77 = arith.divf %74, %76 : vector<8x1xf32>
    %78 = math.log %77 : vector<8x1xf32>
    %cst_33 = arith.constant 5.000000e-01 : f32
    %79 = vector.broadcast %cst_33 : f32 to vector<8x1xf32>
    %80 = arith.mulf %79, %78 : vector<8x1xf32>
    %81 = tpu.reciprocal %68 {approx = true} : vector<8x1xf32> -> vector<8x1xf32>
    %82 = arith.mulf %80, %81 : vector<8x1xf32>
    %cst_34 = arith.constant dense<0.000000e+00> : vector<8x64xf32>
    %83 = tpu.matmul %62, %2, %cst_34 {dimension_numbers = #tpu.dot_dimension_numbers<[1], [0], [0], [1], [0, 0, 1, 1], [], []>} : vector<8x32xf32>, vector<32x64xf32>, vector<8x64xf32> -> vector<8x64xf32>
    %cst_35 = arith.constant dense<0.000000e+00> : vector<8x64xf32>
    %84 = tpu.matmul %27, %3, %cst_35 {dimension_numbers = #tpu.dot_dimension_numbers<[1], [0], [0], [1], [0, 0, 1, 1], [], []>} : vector<8x32xf32>, vector<32x64xf32>, vector<8x64xf32> -> vector<8x64xf32>
    %85 = vector.extract_strided_slice %83 {offsets = [0, 0], sizes = [8, 32], strides = [1, 1]} : vector<8x64xf32> to vector<8x32xf32>
    %86 = arith.mulf %85, %85 : vector<8x32xf32>
    %cst_36 = arith.constant dense<0.000000e+00> : vector<8xf32>
    %87 = vector.multi_reduction <add>, %86, %cst_36 [1] : vector<8x32xf32> to vector<8xf32>
    %88 = vector.shape_cast %87 : vector<8xf32> to vector<8x1xf32>
    %89 = math.sqrt %88 : vector<8x1xf32>
    %cst_37 = arith.constant 1.000000e-15 : f32
    %90 = vector.broadcast %cst_37 : f32 to vector<8x1xf32>
    %91 = arith.maximumf %89, %90 : vector<8x1xf32>
    %92 = arith.mulf %91, %82 : vector<8x1xf32>
    %cst_38 = arith.constant -1.500000e+01 : f32
    %cst_39 = arith.constant 1.500000e+01 : f32
    %93 = vector.broadcast %cst_38 : f32 to vector<8x1xf32>
    %94 = arith.maximumf %93, %92 : vector<8x1xf32>
    %95 = vector.broadcast %cst_39 : f32 to vector<8x1xf32>
    %96 = arith.minimumf %95, %94 : vector<8x1xf32>
    %97 = math.tanh %96 : vector<8x1xf32>
    %98 = vector.broadcast %97 : vector<8x1xf32> to vector<8x32xf32>
    %99 = arith.mulf %98, %85 : vector<8x32xf32>
    %100 = tpu.reciprocal %91 {approx = true} : vector<8x1xf32> -> vector<8x1xf32>
    %101 = vector.broadcast %100 : vector<8x1xf32> to vector<8x32xf32>
    %102 = arith.mulf %99, %101 : vector<8x32xf32>
    %103 = arith.mulf %102, %102 : vector<8x32xf32>
    %cst_40 = arith.constant dense<0.000000e+00> : vector<8xf32>
    %104 = vector.multi_reduction <add>, %103, %cst_40 [1] : vector<8x32xf32> to vector<8xf32>
    %105 = vector.shape_cast %104 : vector<8xf32> to vector<8x1xf32>
    %106 = math.sqrt %105 : vector<8x1xf32>
    %cst_41 = arith.constant 0.999989986 : f32
    %107 = vector.broadcast %cst_41 : f32 to vector<8x1xf32>
    %108 = arith.cmpf ogt, %106, %107 : vector<8x1xf32>
    %cst_42 = arith.constant 1.000000e-15 : f32
    %109 = vector.broadcast %cst_42 : f32 to vector<8x1xf32>
    %110 = arith.maximumf %106, %109 : vector<8x1xf32>
    %111 = tpu.reciprocal %110 {approx = true} : vector<8x1xf32> -> vector<8x1xf32>
    %cst_43 = arith.constant 0.999989986 : f32
    %112 = vector.broadcast %cst_43 : f32 to vector<8x1xf32>
    %113 = arith.mulf %112, %111 : vector<8x1xf32>
    %cst_44 = arith.constant 1.000000e+00 : f32
    %114 = vector.broadcast %cst_44 : f32 to vector<8x1xf32>
    %115 = arith.select %108, %113, %114 : vector<8x1xi1>, vector<8x1xf32>
    %116 = vector.broadcast %115 : vector<8x1xf32> to vector<8x32xf32>
    %117 = arith.mulf %102, %116 : vector<8x32xf32>
    %118 = vector.extract_strided_slice %83 {offsets = [0, 32], sizes = [8, 32], strides = [1, 1]} : vector<8x64xf32> to vector<8x32xf32>
    %119 = arith.mulf %118, %118 : vector<8x32xf32>
    %cst_45 = arith.constant dense<0.000000e+00> : vector<8xf32>
    %120 = vector.multi_reduction <add>, %119, %cst_45 [1] : vector<8x32xf32> to vector<8xf32>
    %121 = vector.shape_cast %120 : vector<8xf32> to vector<8x1xf32>
    %122 = math.sqrt %121 : vector<8x1xf32>
    %cst_46 = arith.constant 1.000000e-15 : f32
    %123 = vector.broadcast %cst_46 : f32 to vector<8x1xf32>
    %124 = arith.maximumf %122, %123 : vector<8x1xf32>
    %125 = arith.mulf %124, %82 : vector<8x1xf32>
    %cst_47 = arith.constant -1.500000e+01 : f32
    %cst_48 = arith.constant 1.500000e+01 : f32
    %126 = vector.broadcast %cst_47 : f32 to vector<8x1xf32>
    %127 = arith.maximumf %126, %125 : vector<8x1xf32>
    %128 = vector.broadcast %cst_48 : f32 to vector<8x1xf32>
    %129 = arith.minimumf %128, %127 : vector<8x1xf32>
    %130 = math.tanh %129 : vector<8x1xf32>
    %131 = vector.broadcast %130 : vector<8x1xf32> to vector<8x32xf32>
    %132 = arith.mulf %131, %118 : vector<8x32xf32>
    %133 = tpu.reciprocal %124 {approx = true} : vector<8x1xf32> -> vector<8x1xf32>
    %134 = vector.broadcast %133 : vector<8x1xf32> to vector<8x32xf32>
    %135 = arith.mulf %132, %134 : vector<8x32xf32>
    %136 = arith.mulf %135, %135 : vector<8x32xf32>
    %cst_49 = arith.constant dense<0.000000e+00> : vector<8xf32>
    %137 = vector.multi_reduction <add>, %136, %cst_49 [1] : vector<8x32xf32> to vector<8xf32>
    %138 = vector.shape_cast %137 : vector<8xf32> to vector<8x1xf32>
    %139 = math.sqrt %138 : vector<8x1xf32>
    %cst_50 = arith.constant 0.999989986 : f32
    %140 = vector.broadcast %cst_50 : f32 to vector<8x1xf32>
    %141 = arith.cmpf ogt, %139, %140 : vector<8x1xf32>
    %cst_51 = arith.constant 1.000000e-15 : f32
    %142 = vector.broadcast %cst_51 : f32 to vector<8x1xf32>
    %143 = arith.maximumf %139, %142 : vector<8x1xf32>
    %144 = tpu.reciprocal %143 {approx = true} : vector<8x1xf32> -> vector<8x1xf32>
    %cst_52 = arith.constant 0.999989986 : f32
    %145 = vector.broadcast %cst_52 : f32 to vector<8x1xf32>
    %146 = arith.mulf %145, %144 : vector<8x1xf32>
    %cst_53 = arith.constant 1.000000e+00 : f32
    %147 = vector.broadcast %cst_53 : f32 to vector<8x1xf32>
    %148 = arith.select %141, %146, %147 : vector<8x1xi1>, vector<8x1xf32>
    %149 = vector.broadcast %148 : vector<8x1xf32> to vector<8x32xf32>
    %150 = arith.mulf %135, %149 : vector<8x32xf32>
    %151 = vector.extract_strided_slice %84 {offsets = [0, 0], sizes = [8, 32], strides = [1, 1]} : vector<8x64xf32> to vector<8x32xf32>
    %152 = arith.mulf %151, %151 : vector<8x32xf32>
    %cst_54 = arith.constant dense<0.000000e+00> : vector<8xf32>
    %153 = vector.multi_reduction <add>, %152, %cst_54 [1] : vector<8x32xf32> to vector<8xf32>
    %154 = vector.shape_cast %153 : vector<8xf32> to vector<8x1xf32>
    %155 = math.sqrt %154 : vector<8x1xf32>
    %cst_55 = arith.constant 1.000000e-15 : f32
    %156 = vector.broadcast %cst_55 : f32 to vector<8x1xf32>
    %157 = arith.maximumf %155, %156 : vector<8x1xf32>
    %158 = arith.mulf %157, %47 : vector<8x1xf32>
    %cst_56 = arith.constant -1.500000e+01 : f32
    %cst_57 = arith.constant 1.500000e+01 : f32
    %159 = vector.broadcast %cst_56 : f32 to vector<8x1xf32>
    %160 = arith.maximumf %159, %158 : vector<8x1xf32>
    %161 = vector.broadcast %cst_57 : f32 to vector<8x1xf32>
    %162 = arith.minimumf %161, %160 : vector<8x1xf32>
    %163 = math.tanh %162 : vector<8x1xf32>
    %164 = vector.broadcast %163 : vector<8x1xf32> to vector<8x32xf32>
    %165 = arith.mulf %164, %151 : vector<8x32xf32>
    %166 = tpu.reciprocal %157 {approx = true} : vector<8x1xf32> -> vector<8x1xf32>
    %167 = vector.broadcast %166 : vector<8x1xf32> to vector<8x32xf32>
    %168 = arith.mulf %165, %167 : vector<8x32xf32>
    %169 = arith.mulf %168, %168 : vector<8x32xf32>
    %cst_58 = arith.constant dense<0.000000e+00> : vector<8xf32>
    %170 = vector.multi_reduction <add>, %169, %cst_58 [1] : vector<8x32xf32> to vector<8xf32>
    %171 = vector.shape_cast %170 : vector<8xf32> to vector<8x1xf32>
    %172 = math.sqrt %171 : vector<8x1xf32>
    %cst_59 = arith.constant 0.999989986 : f32
    %173 = vector.broadcast %cst_59 : f32 to vector<8x1xf32>
    %174 = arith.cmpf ogt, %172, %173 : vector<8x1xf32>
    %cst_60 = arith.constant 1.000000e-15 : f32
    %175 = vector.broadcast %cst_60 : f32 to vector<8x1xf32>
    %176 = arith.maximumf %172, %175 : vector<8x1xf32>
    %177 = tpu.reciprocal %176 {approx = true} : vector<8x1xf32> -> vector<8x1xf32>
    %cst_61 = arith.constant 0.999989986 : f32
    %178 = vector.broadcast %cst_61 : f32 to vector<8x1xf32>
    %179 = arith.mulf %178, %177 : vector<8x1xf32>
    %cst_62 = arith.constant 1.000000e+00 : f32
    %180 = vector.broadcast %cst_62 : f32 to vector<8x1xf32>
    %181 = arith.select %174, %179, %180 : vector<8x1xi1>, vector<8x1xf32>
    %182 = vector.broadcast %181 : vector<8x1xf32> to vector<8x32xf32>
    %183 = arith.mulf %168, %182 : vector<8x32xf32>
    %184 = vector.extract_strided_slice %84 {offsets = [0, 32], sizes = [8, 32], strides = [1, 1]} : vector<8x64xf32> to vector<8x32xf32>
    %185 = arith.mulf %184, %184 : vector<8x32xf32>
    %cst_63 = arith.constant dense<0.000000e+00> : vector<8xf32>
    %186 = vector.multi_reduction <add>, %185, %cst_63 [1] : vector<8x32xf32> to vector<8xf32>
    %187 = vector.shape_cast %186 : vector<8xf32> to vector<8x1xf32>
    %188 = math.sqrt %187 : vector<8x1xf32>
    %cst_64 = arith.constant 1.000000e-15 : f32
    %189 = vector.broadcast %cst_64 : f32 to vector<8x1xf32>
    %190 = arith.maximumf %188, %189 : vector<8x1xf32>
    %191 = arith.mulf %190, %47 : vector<8x1xf32>
    %cst_65 = arith.constant -1.500000e+01 : f32
    %cst_66 = arith.constant 1.500000e+01 : f32
    %192 = vector.broadcast %cst_65 : f32 to vector<8x1xf32>
    %193 = arith.maximumf %192, %191 : vector<8x1xf32>
    %194 = vector.broadcast %cst_66 : f32 to vector<8x1xf32>
    %195 = arith.minimumf %194, %193 : vector<8x1xf32>
    %196 = math.tanh %195 : vector<8x1xf32>
    %197 = vector.broadcast %196 : vector<8x1xf32> to vector<8x32xf32>
    %198 = arith.mulf %197, %184 : vector<8x32xf32>
    %199 = tpu.reciprocal %190 {approx = true} : vector<8x1xf32> -> vector<8x1xf32>
    %200 = vector.broadcast %199 : vector<8x1xf32> to vector<8x32xf32>
    %201 = arith.mulf %198, %200 : vector<8x32xf32>
    %202 = arith.mulf %201, %201 : vector<8x32xf32>
    %cst_67 = arith.constant dense<0.000000e+00> : vector<8xf32>
    %203 = vector.multi_reduction <add>, %202, %cst_67 [1] : vector<8x32xf32> to vector<8xf32>
    %204 = vector.shape_cast %203 : vector<8xf32> to vector<8x1xf32>
    %205 = math.sqrt %204 : vector<8x1xf32>
    %cst_68 = arith.constant 0.999989986 : f32
    %206 = vector.broadcast %cst_68 : f32 to vector<8x1xf32>
    %207 = arith.cmpf ogt, %205, %206 : vector<8x1xf32>
    %cst_69 = arith.constant 1.000000e-15 : f32
    %208 = vector.broadcast %cst_69 : f32 to vector<8x1xf32>
    %209 = arith.maximumf %205, %208 : vector<8x1xf32>
    %210 = tpu.reciprocal %209 {approx = true} : vector<8x1xf32> -> vector<8x1xf32>
    %cst_70 = arith.constant 0.999989986 : f32
    %211 = vector.broadcast %cst_70 : f32 to vector<8x1xf32>
    %212 = arith.mulf %211, %210 : vector<8x1xf32>
    %cst_71 = arith.constant 1.000000e+00 : f32
    %213 = vector.broadcast %cst_71 : f32 to vector<8x1xf32>
    %214 = arith.select %207, %212, %213 : vector<8x1xi1>, vector<8x1xf32>
    %215 = vector.broadcast %214 : vector<8x1xf32> to vector<8x32xf32>
    %216 = arith.mulf %201, %215 : vector<8x32xf32>
    %217 = arith.mulf %117, %183 : vector<8x32xf32>
    %cst_72 = arith.constant dense<0.000000e+00> : vector<8xf32>
    %218 = vector.multi_reduction <add>, %217, %cst_72 [1] : vector<8x32xf32> to vector<8xf32>
    %219 = vector.shape_cast %218 : vector<8xf32> to vector<8x1xf32>
    %220 = arith.mulf %117, %117 : vector<8x32xf32>
    %cst_73 = arith.constant dense<0.000000e+00> : vector<8xf32>
    %221 = vector.multi_reduction <add>, %220, %cst_73 [1] : vector<8x32xf32> to vector<8xf32>
    %222 = vector.shape_cast %221 : vector<8xf32> to vector<8x1xf32>
    %223 = arith.mulf %183, %183 : vector<8x32xf32>
    %cst_74 = arith.constant dense<0.000000e+00> : vector<8xf32>
    %224 = vector.multi_reduction <add>, %223, %cst_74 [1] : vector<8x32xf32> to vector<8xf32>
    %225 = vector.shape_cast %224 : vector<8xf32> to vector<8x1xf32>
    %cst_75 = arith.constant 2.000000e+00 : f32
    %226 = vector.broadcast %cst_75 : f32 to vector<8x1xf32>
    %227 = arith.mulf %226, %219 : vector<8x1xf32>
    %cst_76 = arith.constant 1.000000e+00 : f32
    %228 = vector.broadcast %cst_76 : f32 to vector<8x1xf32>
    %229 = arith.addf %228, %227 : vector<8x1xf32>
    %230 = arith.addf %229, %225 : vector<8x1xf32>
    %231 = vector.broadcast %230 : vector<8x1xf32> to vector<8x32xf32>
    %232 = arith.mulf %231, %117 : vector<8x32xf32>
    %cst_77 = arith.constant 1.000000e+00 : f32
    %233 = vector.broadcast %cst_77 : f32 to vector<8x1xf32>
    %234 = arith.subf %233, %222 : vector<8x1xf32>
    %235 = vector.broadcast %234 : vector<8x1xf32> to vector<8x32xf32>
    %236 = arith.mulf %235, %183 : vector<8x32xf32>
    %237 = arith.addf %232, %236 : vector<8x32xf32>
    %cst_78 = arith.constant 2.000000e+00 : f32
    %238 = vector.broadcast %cst_78 : f32 to vector<8x1xf32>
    %239 = arith.mulf %238, %219 : vector<8x1xf32>
    %cst_79 = arith.constant 1.000000e+00 : f32
    %240 = vector.broadcast %cst_79 : f32 to vector<8x1xf32>
    %241 = arith.addf %240, %239 : vector<8x1xf32>
    %242 = arith.mulf %222, %225 : vector<8x1xf32>
    %243 = arith.addf %241, %242 : vector<8x1xf32>
    %cst_80 = arith.constant 1.000000e-15 : f32
    %244 = vector.broadcast %cst_80 : f32 to vector<8x1xf32>
    %245 = arith.maximumf %243, %244 : vector<8x1xf32>
    %246 = tpu.reciprocal %245 {approx = true} : vector<8x1xf32> -> vector<8x1xf32>
    %247 = vector.broadcast %246 : vector<8x1xf32> to vector<8x32xf32>
    %248 = arith.mulf %237, %247 : vector<8x32xf32>
    %249 = arith.mulf %248, %248 : vector<8x32xf32>
    %cst_81 = arith.constant dense<0.000000e+00> : vector<8xf32>
    %250 = vector.multi_reduction <add>, %249, %cst_81 [1] : vector<8x32xf32> to vector<8xf32>
    %251 = vector.shape_cast %250 : vector<8xf32> to vector<8x1xf32>
    %252 = math.sqrt %251 : vector<8x1xf32>
    %cst_82 = arith.constant 0.999989986 : f32
    %253 = vector.broadcast %cst_82 : f32 to vector<8x1xf32>
    %254 = arith.cmpf ogt, %252, %253 : vector<8x1xf32>
    %cst_83 = arith.constant 1.000000e-15 : f32
    %255 = vector.broadcast %cst_83 : f32 to vector<8x1xf32>
    %256 = arith.maximumf %252, %255 : vector<8x1xf32>
    %257 = tpu.reciprocal %256 {approx = true} : vector<8x1xf32> -> vector<8x1xf32>
    %cst_84 = arith.constant 0.999989986 : f32
    %258 = vector.broadcast %cst_84 : f32 to vector<8x1xf32>
    %259 = arith.mulf %258, %257 : vector<8x1xf32>
    %cst_85 = arith.constant 1.000000e+00 : f32
    %260 = vector.broadcast %cst_85 : f32 to vector<8x1xf32>
    %261 = arith.select %254, %259, %260 : vector<8x1xi1>, vector<8x1xf32>
    %262 = vector.broadcast %261 : vector<8x1xf32> to vector<8x32xf32>
    %263 = arith.mulf %248, %262 : vector<8x32xf32>
    %264 = vector.broadcast %6 : vector<1x32xf32> to vector<8x32xf32>
    %265 = arith.mulf %263, %264 : vector<8x32xf32>
    %cst_86 = arith.constant dense<0.000000e+00> : vector<8xf32>
    %266 = vector.multi_reduction <add>, %265, %cst_86 [1] : vector<8x32xf32> to vector<8xf32>
    %267 = vector.shape_cast %266 : vector<8xf32> to vector<8x1xf32>
    %268 = arith.mulf %263, %263 : vector<8x32xf32>
    %cst_87 = arith.constant dense<0.000000e+00> : vector<8xf32>
    %269 = vector.multi_reduction <add>, %268, %cst_87 [1] : vector<8x32xf32> to vector<8xf32>
    %270 = vector.shape_cast %269 : vector<8xf32> to vector<8x1xf32>
    %271 = arith.mulf %6, %6 : vector<1x32xf32>
    %cst_88 = arith.constant dense<0.000000e+00> : vector<1xf32>
    %272 = vector.multi_reduction <add>, %271, %cst_88 [1] : vector<1x32xf32> to vector<1xf32>
    %273 = vector.shape_cast %272 : vector<1xf32> to vector<1x1xf32>
    %cst_89 = arith.constant 2.000000e+00 : f32
    %274 = vector.broadcast %cst_89 : f32 to vector<8x1xf32>
    %275 = arith.mulf %274, %267 : vector<8x1xf32>
    %cst_90 = arith.constant 1.000000e+00 : f32
    %276 = vector.broadcast %cst_90 : f32 to vector<8x1xf32>
    %277 = arith.addf %276, %275 : vector<8x1xf32>
    %278 = vector.broadcast %273 : vector<1x1xf32> to vector<8x1xf32>
    %279 = arith.addf %277, %278 : vector<8x1xf32>
    %280 = vector.broadcast %279 : vector<8x1xf32> to vector<8x32xf32>
    %281 = arith.mulf %280, %263 : vector<8x32xf32>
    %cst_91 = arith.constant 1.000000e+00 : f32
    %282 = vector.broadcast %cst_91 : f32 to vector<8x1xf32>
    %283 = arith.subf %282, %270 : vector<8x1xf32>
    %284 = vector.broadcast %283 : vector<8x1xf32> to vector<8x32xf32>
    %285 = vector.broadcast %6 : vector<1x32xf32> to vector<8x32xf32>
    %286 = arith.mulf %284, %285 : vector<8x32xf32>
    %287 = arith.addf %281, %286 : vector<8x32xf32>
    %cst_92 = arith.constant 2.000000e+00 : f32
    %288 = vector.broadcast %cst_92 : f32 to vector<8x1xf32>
    %289 = arith.mulf %288, %267 : vector<8x1xf32>
    %cst_93 = arith.constant 1.000000e+00 : f32
    %290 = vector.broadcast %cst_93 : f32 to vector<8x1xf32>
    %291 = arith.addf %290, %289 : vector<8x1xf32>
    %292 = vector.broadcast %273 : vector<1x1xf32> to vector<8x1xf32>
    %293 = arith.mulf %270, %292 : vector<8x1xf32>
    %294 = arith.addf %291, %293 : vector<8x1xf32>
    %cst_94 = arith.constant 1.000000e-15 : f32
    %295 = vector.broadcast %cst_94 : f32 to vector<8x1xf32>
    %296 = arith.maximumf %294, %295 : vector<8x1xf32>
    %297 = tpu.reciprocal %296 {approx = true} : vector<8x1xf32> -> vector<8x1xf32>
    %298 = vector.broadcast %297 : vector<8x1xf32> to vector<8x32xf32>
    %299 = arith.mulf %287, %298 : vector<8x32xf32>
    %300 = arith.mulf %299, %299 : vector<8x32xf32>
    %cst_95 = arith.constant dense<0.000000e+00> : vector<8xf32>
    %301 = vector.multi_reduction <add>, %300, %cst_95 [1] : vector<8x32xf32> to vector<8xf32>
    %302 = vector.shape_cast %301 : vector<8xf32> to vector<8x1xf32>
    %303 = math.sqrt %302 : vector<8x1xf32>
    %cst_96 = arith.constant 0.999989986 : f32
    %304 = vector.broadcast %cst_96 : f32 to vector<8x1xf32>
    %305 = arith.cmpf ogt, %303, %304 : vector<8x1xf32>
    %cst_97 = arith.constant 1.000000e-15 : f32
    %306 = vector.broadcast %cst_97 : f32 to vector<8x1xf32>
    %307 = arith.maximumf %303, %306 : vector<8x1xf32>
    %308 = tpu.reciprocal %307 {approx = true} : vector<8x1xf32> -> vector<8x1xf32>
    %cst_98 = arith.constant 0.999989986 : f32
    %309 = vector.broadcast %cst_98 : f32 to vector<8x1xf32>
    %310 = arith.mulf %309, %308 : vector<8x1xf32>
    %cst_99 = arith.constant 1.000000e+00 : f32
    %311 = vector.broadcast %cst_99 : f32 to vector<8x1xf32>
    %312 = arith.select %305, %310, %311 : vector<8x1xi1>, vector<8x1xf32>
    %313 = vector.broadcast %312 : vector<8x1xf32> to vector<8x32xf32>
    %314 = arith.mulf %299, %313 : vector<8x32xf32>
    %315 = arith.mulf %314, %314 : vector<8x32xf32>
    %cst_100 = arith.constant dense<0.000000e+00> : vector<8xf32>
    %316 = vector.multi_reduction <add>, %315, %cst_100 [1] : vector<8x32xf32> to vector<8xf32>
    %317 = vector.shape_cast %316 : vector<8xf32> to vector<8x1xf32>
    %318 = math.sqrt %317 : vector<8x1xf32>
    %cst_101 = arith.constant 0.999989986 : f32
    %319 = vector.broadcast %cst_101 : f32 to vector<8x1xf32>
    %320 = arith.cmpf ogt, %318, %319 : vector<8x1xf32>
    %cst_102 = arith.constant 1.000000e-15 : f32
    %321 = vector.broadcast %cst_102 : f32 to vector<8x1xf32>
    %322 = arith.maximumf %318, %321 : vector<8x1xf32>
    %323 = tpu.reciprocal %322 {approx = true} : vector<8x1xf32> -> vector<8x1xf32>
    %cst_103 = arith.constant 0.999989986 : f32
    %324 = vector.broadcast %cst_103 : f32 to vector<8x1xf32>
    %325 = arith.mulf %324, %323 : vector<8x1xf32>
    %cst_104 = arith.constant 1.000000e+00 : f32
    %326 = vector.broadcast %cst_104 : f32 to vector<8x1xf32>
    %327 = arith.select %320, %325, %326 : vector<8x1xi1>, vector<8x1xf32>
    %328 = vector.broadcast %327 : vector<8x1xf32> to vector<8x32xf32>
    %329 = arith.mulf %314, %328 : vector<8x32xf32>
    %330 = arith.mulf %329, %329 : vector<8x32xf32>
    %cst_105 = arith.constant dense<0.000000e+00> : vector<8xf32>
    %331 = vector.multi_reduction <add>, %330, %cst_105 [1] : vector<8x32xf32> to vector<8xf32>
    %332 = vector.shape_cast %331 : vector<8xf32> to vector<8x1xf32>
    %333 = math.sqrt %332 : vector<8x1xf32>
    %cst_106 = arith.constant 1.000000e-15 : f32
    %334 = vector.broadcast %cst_106 : f32 to vector<8x1xf32>
    %335 = arith.maximumf %333, %334 : vector<8x1xf32>
    %cst_107 = arith.constant 0.000000e+00 : f32
    %cst_108 = arith.constant 0.99999988 : f32
    %336 = vector.broadcast %cst_107 : f32 to vector<8x1xf32>
    %337 = arith.maximumf %336, %335 : vector<8x1xf32>
    %338 = vector.broadcast %cst_108 : f32 to vector<8x1xf32>
    %339 = arith.minimumf %338, %337 : vector<8x1xf32>
    %cst_109 = arith.constant 1.000000e+00 : f32
    %340 = vector.broadcast %cst_109 : f32 to vector<8x1xf32>
    %341 = arith.addf %340, %339 : vector<8x1xf32>
    %cst_110 = arith.constant 1.000000e+00 : f32
    %342 = vector.broadcast %cst_110 : f32 to vector<8x1xf32>
    %343 = arith.subf %342, %339 : vector<8x1xf32>
    %344 = arith.divf %341, %343 : vector<8x1xf32>
    %345 = math.log %344 : vector<8x1xf32>
    %cst_111 = arith.constant 5.000000e-01 : f32
    %346 = vector.broadcast %cst_111 : f32 to vector<8x1xf32>
    %347 = arith.mulf %346, %345 : vector<8x1xf32>
    %348 = tpu.reciprocal %335 {approx = true} : vector<8x1xf32> -> vector<8x1xf32>
    %349 = arith.mulf %347, %348 : vector<8x1xf32>
    %350 = vector.broadcast %349 : vector<8x1xf32> to vector<8x32xf32>
    %351 = arith.mulf %350, %329 : vector<8x32xf32>
    %cst_112 = arith.constant dense<0.000000e+00> : vector<8xf32>
    %352 = vector.multi_reduction <add>, %351, %cst_112 [1] : vector<8x32xf32> to vector<8xf32>
    %353 = vector.shape_cast %352 : vector<8xf32> to vector<8x1xf32>
    %cst_113 = arith.constant 3.200000e+01 : f32
    %354 = vector.broadcast %cst_113 : f32 to vector<8x1xf32>
    %355 = arith.divf %353, %354 : vector<8x1xf32>
    %356 = vector.broadcast %355 : vector<8x1xf32> to vector<8x32xf32>
    %357 = arith.subf %351, %356 : vector<8x32xf32>
    %358 = arith.mulf %357, %357 : vector<8x32xf32>
    %cst_114 = arith.constant dense<0.000000e+00> : vector<8xf32>
    %359 = vector.multi_reduction <add>, %358, %cst_114 [1] : vector<8x32xf32> to vector<8xf32>
    %360 = vector.shape_cast %359 : vector<8xf32> to vector<8x1xf32>
    %cst_115 = arith.constant 3.200000e+01 : f32
    %361 = vector.broadcast %cst_115 : f32 to vector<8x1xf32>
    %362 = arith.divf %360, %361 : vector<8x1xf32>
    %363 = vector.broadcast %355 : vector<8x1xf32> to vector<8x32xf32>
    %364 = arith.subf %351, %363 : vector<8x32xf32>
    %cst_116 = arith.constant 9.99999974E-6 : f32
    %365 = vector.broadcast %cst_116 : f32 to vector<8x1xf32>
    %366 = arith.addf %362, %365 : vector<8x1xf32>
    %367 = math.rsqrt %366 : vector<8x1xf32>
    %368 = vector.broadcast %367 : vector<8x1xf32> to vector<8x32xf32>
    %369 = arith.mulf %364, %368 : vector<8x32xf32>
    %370 = vector.broadcast %9 : vector<1x32xf32> to vector<8x32xf32>
    %371 = arith.mulf %369, %370 : vector<8x32xf32>
    %372 = vector.broadcast %10 : vector<1x32xf32> to vector<8x32xf32>
    %373 = arith.addf %371, %372 : vector<8x32xf32>
    %374 = arith.negf %373 : vector<8x32xf32>
    %375 = math.exp %374 : vector<8x32xf32>
    %cst_117 = arith.constant 1.000000e+00 : f32
    %376 = vector.broadcast %cst_117 : f32 to vector<8x32xf32>
    %377 = arith.addf %376, %375 : vector<8x32xf32>
    %378 = arith.divf %376, %377 : vector<8x32xf32>
    %379 = arith.mulf %150, %216 : vector<8x32xf32>
    %cst_118 = arith.constant dense<0.000000e+00> : vector<8xf32>
    %380 = vector.multi_reduction <add>, %379, %cst_118 [1] : vector<8x32xf32> to vector<8xf32>
    %381 = vector.shape_cast %380 : vector<8xf32> to vector<8x1xf32>
    %382 = arith.mulf %150, %150 : vector<8x32xf32>
    %cst_119 = arith.constant dense<0.000000e+00> : vector<8xf32>
    %383 = vector.multi_reduction <add>, %382, %cst_119 [1] : vector<8x32xf32> to vector<8xf32>
    %384 = vector.shape_cast %383 : vector<8xf32> to vector<8x1xf32>
    %385 = arith.mulf %216, %216 : vector<8x32xf32>
    %cst_120 = arith.constant dense<0.000000e+00> : vector<8xf32>
    %386 = vector.multi_reduction <add>, %385, %cst_120 [1] : vector<8x32xf32> to vector<8xf32>
    %387 = vector.shape_cast %386 : vector<8xf32> to vector<8x1xf32>
    %cst_121 = arith.constant 2.000000e+00 : f32
    %388 = vector.broadcast %cst_121 : f32 to vector<8x1xf32>
    %389 = arith.mulf %388, %381 : vector<8x1xf32>
    %cst_122 = arith.constant 1.000000e+00 : f32
    %390 = vector.broadcast %cst_122 : f32 to vector<8x1xf32>
    %391 = arith.addf %390, %389 : vector<8x1xf32>
    %392 = arith.addf %391, %387 : vector<8x1xf32>
    %393 = vector.broadcast %392 : vector<8x1xf32> to vector<8x32xf32>
    %394 = arith.mulf %393, %150 : vector<8x32xf32>
    %cst_123 = arith.constant 1.000000e+00 : f32
    %395 = vector.broadcast %cst_123 : f32 to vector<8x1xf32>
    %396 = arith.subf %395, %384 : vector<8x1xf32>
    %397 = vector.broadcast %396 : vector<8x1xf32> to vector<8x32xf32>
    %398 = arith.mulf %397, %216 : vector<8x32xf32>
    %399 = arith.addf %394, %398 : vector<8x32xf32>
    %cst_124 = arith.constant 2.000000e+00 : f32
    %400 = vector.broadcast %cst_124 : f32 to vector<8x1xf32>
    %401 = arith.mulf %400, %381 : vector<8x1xf32>
    %cst_125 = arith.constant 1.000000e+00 : f32
    %402 = vector.broadcast %cst_125 : f32 to vector<8x1xf32>
    %403 = arith.addf %402, %401 : vector<8x1xf32>
    %404 = arith.mulf %384, %387 : vector<8x1xf32>
    %405 = arith.addf %403, %404 : vector<8x1xf32>
    %cst_126 = arith.constant 1.000000e-15 : f32
    %406 = vector.broadcast %cst_126 : f32 to vector<8x1xf32>
    %407 = arith.maximumf %405, %406 : vector<8x1xf32>
    %408 = tpu.reciprocal %407 {approx = true} : vector<8x1xf32> -> vector<8x1xf32>
    %409 = vector.broadcast %408 : vector<8x1xf32> to vector<8x32xf32>
    %410 = arith.mulf %399, %409 : vector<8x32xf32>
    %411 = arith.mulf %410, %410 : vector<8x32xf32>
    %cst_127 = arith.constant dense<0.000000e+00> : vector<8xf32>
    %412 = vector.multi_reduction <add>, %411, %cst_127 [1] : vector<8x32xf32> to vector<8xf32>
    %413 = vector.shape_cast %412 : vector<8xf32> to vector<8x1xf32>
    %414 = math.sqrt %413 : vector<8x1xf32>
    %cst_128 = arith.constant 0.999989986 : f32
    %415 = vector.broadcast %cst_128 : f32 to vector<8x1xf32>
    %416 = arith.cmpf ogt, %414, %415 : vector<8x1xf32>
    %cst_129 = arith.constant 1.000000e-15 : f32
    %417 = vector.broadcast %cst_129 : f32 to vector<8x1xf32>
    %418 = arith.maximumf %414, %417 : vector<8x1xf32>
    %419 = tpu.reciprocal %418 {approx = true} : vector<8x1xf32> -> vector<8x1xf32>
    %cst_130 = arith.constant 0.999989986 : f32
    %420 = vector.broadcast %cst_130 : f32 to vector<8x1xf32>
    %421 = arith.mulf %420, %419 : vector<8x1xf32>
    %cst_131 = arith.constant 1.000000e+00 : f32
    %422 = vector.broadcast %cst_131 : f32 to vector<8x1xf32>
    %423 = arith.select %416, %421, %422 : vector<8x1xi1>, vector<8x1xf32>
    %424 = vector.broadcast %423 : vector<8x1xf32> to vector<8x32xf32>
    %425 = arith.mulf %410, %424 : vector<8x32xf32>
    %426 = vector.broadcast %7 : vector<1x32xf32> to vector<8x32xf32>
    %427 = arith.mulf %425, %426 : vector<8x32xf32>
    %cst_132 = arith.constant dense<0.000000e+00> : vector<8xf32>
    %428 = vector.multi_reduction <add>, %427, %cst_132 [1] : vector<8x32xf32> to vector<8xf32>
    %429 = vector.shape_cast %428 : vector<8xf32> to vector<8x1xf32>
    %430 = arith.mulf %425, %425 : vector<8x32xf32>
    %cst_133 = arith.constant dense<0.000000e+00> : vector<8xf32>
    %431 = vector.multi_reduction <add>, %430, %cst_133 [1] : vector<8x32xf32> to vector<8xf32>
    %432 = vector.shape_cast %431 : vector<8xf32> to vector<8x1xf32>
    %433 = arith.mulf %7, %7 : vector<1x32xf32>
    %cst_134 = arith.constant dense<0.000000e+00> : vector<1xf32>
    %434 = vector.multi_reduction <add>, %433, %cst_134 [1] : vector<1x32xf32> to vector<1xf32>
    %435 = vector.shape_cast %434 : vector<1xf32> to vector<1x1xf32>
    %cst_135 = arith.constant 2.000000e+00 : f32
    %436 = vector.broadcast %cst_135 : f32 to vector<8x1xf32>
    %437 = arith.mulf %436, %429 : vector<8x1xf32>
    %cst_136 = arith.constant 1.000000e+00 : f32
    %438 = vector.broadcast %cst_136 : f32 to vector<8x1xf32>
    %439 = arith.addf %438, %437 : vector<8x1xf32>
    %440 = vector.broadcast %435 : vector<1x1xf32> to vector<8x1xf32>
    %441 = arith.addf %439, %440 : vector<8x1xf32>
    %442 = vector.broadcast %441 : vector<8x1xf32> to vector<8x32xf32>
    %443 = arith.mulf %442, %425 : vector<8x32xf32>
    %cst_137 = arith.constant 1.000000e+00 : f32
    %444 = vector.broadcast %cst_137 : f32 to vector<8x1xf32>
    %445 = arith.subf %444, %432 : vector<8x1xf32>
    %446 = vector.broadcast %445 : vector<8x1xf32> to vector<8x32xf32>
    %447 = vector.broadcast %7 : vector<1x32xf32> to vector<8x32xf32>
    %448 = arith.mulf %446, %447 : vector<8x32xf32>
    %449 = arith.addf %443, %448 : vector<8x32xf32>
    %cst_138 = arith.constant 2.000000e+00 : f32
    %450 = vector.broadcast %cst_138 : f32 to vector<8x1xf32>
    %451 = arith.mulf %450, %429 : vector<8x1xf32>
    %cst_139 = arith.constant 1.000000e+00 : f32
    %452 = vector.broadcast %cst_139 : f32 to vector<8x1xf32>
    %453 = arith.addf %452, %451 : vector<8x1xf32>
    %454 = vector.broadcast %435 : vector<1x1xf32> to vector<8x1xf32>
    %455 = arith.mulf %432, %454 : vector<8x1xf32>
    %456 = arith.addf %453, %455 : vector<8x1xf32>
    %cst_140 = arith.constant 1.000000e-15 : f32
    %457 = vector.broadcast %cst_140 : f32 to vector<8x1xf32>
    %458 = arith.maximumf %456, %457 : vector<8x1xf32>
    %459 = tpu.reciprocal %458 {approx = true} : vector<8x1xf32> -> vector<8x1xf32>
    %460 = vector.broadcast %459 : vector<8x1xf32> to vector<8x32xf32>
    %461 = arith.mulf %449, %460 : vector<8x32xf32>
    %462 = arith.mulf %461, %461 : vector<8x32xf32>
    %cst_141 = arith.constant dense<0.000000e+00> : vector<8xf32>
    %463 = vector.multi_reduction <add>, %462, %cst_141 [1] : vector<8x32xf32> to vector<8xf32>
    %464 = vector.shape_cast %463 : vector<8xf32> to vector<8x1xf32>
    %465 = math.sqrt %464 : vector<8x1xf32>
    %cst_142 = arith.constant 0.999989986 : f32
    %466 = vector.broadcast %cst_142 : f32 to vector<8x1xf32>
    %467 = arith.cmpf ogt, %465, %466 : vector<8x1xf32>
    %cst_143 = arith.constant 1.000000e-15 : f32
    %468 = vector.broadcast %cst_143 : f32 to vector<8x1xf32>
    %469 = arith.maximumf %465, %468 : vector<8x1xf32>
    %470 = tpu.reciprocal %469 {approx = true} : vector<8x1xf32> -> vector<8x1xf32>
    %cst_144 = arith.constant 0.999989986 : f32
    %471 = vector.broadcast %cst_144 : f32 to vector<8x1xf32>
    %472 = arith.mulf %471, %470 : vector<8x1xf32>
    %cst_145 = arith.constant 1.000000e+00 : f32
    %473 = vector.broadcast %cst_145 : f32 to vector<8x1xf32>
    %474 = arith.select %467, %472, %473 : vector<8x1xi1>, vector<8x1xf32>
    %475 = vector.broadcast %474 : vector<8x1xf32> to vector<8x32xf32>
    %476 = arith.mulf %461, %475 : vector<8x32xf32>
    %477 = arith.mulf %476, %476 : vector<8x32xf32>
    %cst_146 = arith.constant dense<0.000000e+00> : vector<8xf32>
    %478 = vector.multi_reduction <add>, %477, %cst_146 [1] : vector<8x32xf32> to vector<8xf32>
    %479 = vector.shape_cast %478 : vector<8xf32> to vector<8x1xf32>
    %480 = math.sqrt %479 : vector<8x1xf32>
    %cst_147 = arith.constant 0.999989986 : f32
    %481 = vector.broadcast %cst_147 : f32 to vector<8x1xf32>
    %482 = arith.cmpf ogt, %480, %481 : vector<8x1xf32>
    %cst_148 = arith.constant 1.000000e-15 : f32
    %483 = vector.broadcast %cst_148 : f32 to vector<8x1xf32>
    %484 = arith.maximumf %480, %483 : vector<8x1xf32>
    %485 = tpu.reciprocal %484 {approx = true} : vector<8x1xf32> -> vector<8x1xf32>
    %cst_149 = arith.constant 0.999989986 : f32
    %486 = vector.broadcast %cst_149 : f32 to vector<8x1xf32>
    %487 = arith.mulf %486, %485 : vector<8x1xf32>
    %cst_150 = arith.constant 1.000000e+00 : f32
    %488 = vector.broadcast %cst_150 : f32 to vector<8x1xf32>
    %489 = arith.select %482, %487, %488 : vector<8x1xi1>, vector<8x1xf32>
    %490 = vector.broadcast %489 : vector<8x1xf32> to vector<8x32xf32>
    %491 = arith.mulf %476, %490 : vector<8x32xf32>
    %492 = arith.mulf %491, %491 : vector<8x32xf32>
    %cst_151 = arith.constant dense<0.000000e+00> : vector<8xf32>
    %493 = vector.multi_reduction <add>, %492, %cst_151 [1] : vector<8x32xf32> to vector<8xf32>
    %494 = vector.shape_cast %493 : vector<8xf32> to vector<8x1xf32>
    %495 = math.sqrt %494 : vector<8x1xf32>
    %cst_152 = arith.constant 1.000000e-15 : f32
    %496 = vector.broadcast %cst_152 : f32 to vector<8x1xf32>
    %497 = arith.maximumf %495, %496 : vector<8x1xf32>
    %cst_153 = arith.constant 0.000000e+00 : f32
    %cst_154 = arith.constant 0.99999988 : f32
    %498 = vector.broadcast %cst_153 : f32 to vector<8x1xf32>
    %499 = arith.maximumf %498, %497 : vector<8x1xf32>
    %500 = vector.broadcast %cst_154 : f32 to vector<8x1xf32>
    %501 = arith.minimumf %500, %499 : vector<8x1xf32>
    %cst_155 = arith.constant 1.000000e+00 : f32
    %502 = vector.broadcast %cst_155 : f32 to vector<8x1xf32>
    %503 = arith.addf %502, %501 : vector<8x1xf32>
    %cst_156 = arith.constant 1.000000e+00 : f32
    %504 = vector.broadcast %cst_156 : f32 to vector<8x1xf32>
    %505 = arith.subf %504, %501 : vector<8x1xf32>
    %506 = arith.divf %503, %505 : vector<8x1xf32>
    %507 = math.log %506 : vector<8x1xf32>
    %cst_157 = arith.constant 5.000000e-01 : f32
    %508 = vector.broadcast %cst_157 : f32 to vector<8x1xf32>
    %509 = arith.mulf %508, %507 : vector<8x1xf32>
    %510 = tpu.reciprocal %497 {approx = true} : vector<8x1xf32> -> vector<8x1xf32>
    %511 = arith.mulf %509, %510 : vector<8x1xf32>
    %512 = vector.broadcast %511 : vector<8x1xf32> to vector<8x32xf32>
    %513 = arith.mulf %512, %491 : vector<8x32xf32>
    %cst_158 = arith.constant dense<0.000000e+00> : vector<8xf32>
    %514 = vector.multi_reduction <add>, %513, %cst_158 [1] : vector<8x32xf32> to vector<8xf32>
    %515 = vector.shape_cast %514 : vector<8xf32> to vector<8x1xf32>
    %cst_159 = arith.constant 3.200000e+01 : f32
    %516 = vector.broadcast %cst_159 : f32 to vector<8x1xf32>
    %517 = arith.divf %515, %516 : vector<8x1xf32>
    %518 = vector.broadcast %517 : vector<8x1xf32> to vector<8x32xf32>
    %519 = arith.subf %513, %518 : vector<8x32xf32>
    %520 = arith.mulf %519, %519 : vector<8x32xf32>
    %cst_160 = arith.constant dense<0.000000e+00> : vector<8xf32>
    %521 = vector.multi_reduction <add>, %520, %cst_160 [1] : vector<8x32xf32> to vector<8xf32>
    %522 = vector.shape_cast %521 : vector<8xf32> to vector<8x1xf32>
    %cst_161 = arith.constant 3.200000e+01 : f32
    %523 = vector.broadcast %cst_161 : f32 to vector<8x1xf32>
    %524 = arith.divf %522, %523 : vector<8x1xf32>
    %525 = vector.broadcast %517 : vector<8x1xf32> to vector<8x32xf32>
    %526 = arith.subf %513, %525 : vector<8x32xf32>
    %cst_162 = arith.constant 9.99999974E-6 : f32
    %527 = vector.broadcast %cst_162 : f32 to vector<8x1xf32>
    %528 = arith.addf %524, %527 : vector<8x1xf32>
    %529 = math.rsqrt %528 : vector<8x1xf32>
    %530 = vector.broadcast %529 : vector<8x1xf32> to vector<8x32xf32>
    %531 = arith.mulf %526, %530 : vector<8x32xf32>
    %532 = vector.broadcast %11 : vector<1x32xf32> to vector<8x32xf32>
    %533 = arith.mulf %531, %532 : vector<8x32xf32>
    %534 = vector.broadcast %12 : vector<1x32xf32> to vector<8x32xf32>
    %535 = arith.addf %533, %534 : vector<8x32xf32>
    %536 = arith.negf %535 : vector<8x32xf32>
    %537 = math.exp %536 : vector<8x32xf32>
    %cst_163 = arith.constant 1.000000e+00 : f32
    %538 = vector.broadcast %cst_163 : f32 to vector<8x32xf32>
    %539 = arith.addf %538, %537 : vector<8x32xf32>
    %540 = arith.divf %538, %539 : vector<8x32xf32>
    %541 = arith.mulf %62, %540 : vector<8x32xf32>
    %542 = arith.mulf %541, %541 : vector<8x32xf32>
    %cst_164 = arith.constant dense<0.000000e+00> : vector<8xf32>
    %543 = vector.multi_reduction <add>, %542, %cst_164 [1] : vector<8x32xf32> to vector<8xf32>
    %544 = vector.shape_cast %543 : vector<8xf32> to vector<8x1xf32>
    %545 = math.sqrt %544 : vector<8x1xf32>
    %cst_165 = arith.constant 1.000000e-15 : f32
    %546 = vector.broadcast %cst_165 : f32 to vector<8x1xf32>
    %547 = arith.maximumf %545, %546 : vector<8x1xf32>
    %548 = arith.mulf %547, %82 : vector<8x1xf32>
    %cst_166 = arith.constant -1.500000e+01 : f32
    %cst_167 = arith.constant 1.500000e+01 : f32
    %549 = vector.broadcast %cst_166 : f32 to vector<8x1xf32>
    %550 = arith.maximumf %549, %548 : vector<8x1xf32>
    %551 = vector.broadcast %cst_167 : f32 to vector<8x1xf32>
    %552 = arith.minimumf %551, %550 : vector<8x1xf32>
    %553 = math.tanh %552 : vector<8x1xf32>
    %554 = vector.broadcast %553 : vector<8x1xf32> to vector<8x32xf32>
    %555 = arith.mulf %554, %541 : vector<8x32xf32>
    %556 = tpu.reciprocal %547 {approx = true} : vector<8x1xf32> -> vector<8x1xf32>
    %557 = vector.broadcast %556 : vector<8x1xf32> to vector<8x32xf32>
    %558 = arith.mulf %555, %557 : vector<8x32xf32>
    %559 = arith.mulf %558, %558 : vector<8x32xf32>
    %cst_168 = arith.constant dense<0.000000e+00> : vector<8xf32>
    %560 = vector.multi_reduction <add>, %559, %cst_168 [1] : vector<8x32xf32> to vector<8xf32>
    %561 = vector.shape_cast %560 : vector<8xf32> to vector<8x1xf32>
    %562 = math.sqrt %561 : vector<8x1xf32>
    %cst_169 = arith.constant 0.999989986 : f32
    %563 = vector.broadcast %cst_169 : f32 to vector<8x1xf32>
    %564 = arith.cmpf ogt, %562, %563 : vector<8x1xf32>
    %cst_170 = arith.constant 1.000000e-15 : f32
    %565 = vector.broadcast %cst_170 : f32 to vector<8x1xf32>
    %566 = arith.maximumf %562, %565 : vector<8x1xf32>
    %567 = tpu.reciprocal %566 {approx = true} : vector<8x1xf32> -> vector<8x1xf32>
    %cst_171 = arith.constant 0.999989986 : f32
    %568 = vector.broadcast %cst_171 : f32 to vector<8x1xf32>
    %569 = arith.mulf %568, %567 : vector<8x1xf32>
    %cst_172 = arith.constant 1.000000e+00 : f32
    %570 = vector.broadcast %cst_172 : f32 to vector<8x1xf32>
    %571 = arith.select %564, %569, %570 : vector<8x1xi1>, vector<8x1xf32>
    %572 = vector.broadcast %571 : vector<8x1xf32> to vector<8x32xf32>
    %573 = arith.mulf %558, %572 : vector<8x32xf32>
    %574 = arith.mulf %573, %573 : vector<8x32xf32>
    %cst_173 = arith.constant dense<0.000000e+00> : vector<8xf32>
    %575 = vector.multi_reduction <add>, %574, %cst_173 [1] : vector<8x32xf32> to vector<8xf32>
    %576 = vector.shape_cast %575 : vector<8xf32> to vector<8x1xf32>
    %577 = math.sqrt %576 : vector<8x1xf32>
    %cst_174 = arith.constant 0.999989986 : f32
    %578 = vector.broadcast %cst_174 : f32 to vector<8x1xf32>
    %579 = arith.cmpf ogt, %577, %578 : vector<8x1xf32>
    %cst_175 = arith.constant 1.000000e-15 : f32
    %580 = vector.broadcast %cst_175 : f32 to vector<8x1xf32>
    %581 = arith.maximumf %577, %580 : vector<8x1xf32>
    %582 = tpu.reciprocal %581 {approx = true} : vector<8x1xf32> -> vector<8x1xf32>
    %cst_176 = arith.constant 0.999989986 : f32
    %583 = vector.broadcast %cst_176 : f32 to vector<8x1xf32>
    %584 = arith.mulf %583, %582 : vector<8x1xf32>
    %cst_177 = arith.constant 1.000000e+00 : f32
    %585 = vector.broadcast %cst_177 : f32 to vector<8x1xf32>
    %586 = arith.select %579, %584, %585 : vector<8x1xi1>, vector<8x1xf32>
    %587 = vector.broadcast %586 : vector<8x1xf32> to vector<8x32xf32>
    %588 = arith.mulf %573, %587 : vector<8x32xf32>
    %589 = arith.mulf %588, %588 : vector<8x32xf32>
    %cst_178 = arith.constant dense<0.000000e+00> : vector<8xf32>
    %590 = vector.multi_reduction <add>, %589, %cst_178 [1] : vector<8x32xf32> to vector<8xf32>
    %591 = vector.shape_cast %590 : vector<8xf32> to vector<8x1xf32>
    %592 = math.sqrt %591 : vector<8x1xf32>
    %cst_179 = arith.constant 1.000000e-15 : f32
    %593 = vector.broadcast %cst_179 : f32 to vector<8x1xf32>
    %594 = arith.maximumf %592, %593 : vector<8x1xf32>
    %cst_180 = arith.constant 0.000000e+00 : f32
    %cst_181 = arith.constant 0.99999988 : f32
    %595 = vector.broadcast %cst_180 : f32 to vector<8x1xf32>
    %596 = arith.maximumf %595, %594 : vector<8x1xf32>
    %597 = vector.broadcast %cst_181 : f32 to vector<8x1xf32>
    %598 = arith.minimumf %597, %596 : vector<8x1xf32>
    %cst_182 = arith.constant 1.000000e+00 : f32
    %599 = vector.broadcast %cst_182 : f32 to vector<8x1xf32>
    %600 = arith.addf %599, %598 : vector<8x1xf32>
    %cst_183 = arith.constant 1.000000e+00 : f32
    %601 = vector.broadcast %cst_183 : f32 to vector<8x1xf32>
    %602 = arith.subf %601, %598 : vector<8x1xf32>
    %603 = arith.divf %600, %602 : vector<8x1xf32>
    %604 = math.log %603 : vector<8x1xf32>
    %cst_184 = arith.constant 5.000000e-01 : f32
    %605 = vector.broadcast %cst_184 : f32 to vector<8x1xf32>
    %606 = arith.mulf %605, %604 : vector<8x1xf32>
    %607 = tpu.reciprocal %594 {approx = true} : vector<8x1xf32> -> vector<8x1xf32>
    %608 = arith.mulf %606, %607 : vector<8x1xf32>
    %cst_185 = arith.constant dense<0.000000e+00> : vector<8x32xf32>
    %609 = tpu.matmul %588, %4, %cst_185 {dimension_numbers = #tpu.dot_dimension_numbers<[1], [0], [0], [1], [0, 0, 1, 1], [], []>} : vector<8x32xf32>, vector<32x32xf32>, vector<8x32xf32> -> vector<8x32xf32>
    %610 = arith.mulf %609, %609 : vector<8x32xf32>
    %cst_186 = arith.constant dense<0.000000e+00> : vector<8xf32>
    %611 = vector.multi_reduction <add>, %610, %cst_186 [1] : vector<8x32xf32> to vector<8xf32>
    %612 = vector.shape_cast %611 : vector<8xf32> to vector<8x1xf32>
    %613 = math.sqrt %612 : vector<8x1xf32>
    %cst_187 = arith.constant 1.000000e-15 : f32
    %614 = vector.broadcast %cst_187 : f32 to vector<8x1xf32>
    %615 = arith.maximumf %613, %614 : vector<8x1xf32>
    %616 = arith.mulf %615, %608 : vector<8x1xf32>
    %cst_188 = arith.constant -1.500000e+01 : f32
    %cst_189 = arith.constant 1.500000e+01 : f32
    %617 = vector.broadcast %cst_188 : f32 to vector<8x1xf32>
    %618 = arith.maximumf %617, %616 : vector<8x1xf32>
    %619 = vector.broadcast %cst_189 : f32 to vector<8x1xf32>
    %620 = arith.minimumf %619, %618 : vector<8x1xf32>
    %621 = math.tanh %620 : vector<8x1xf32>
    %622 = vector.broadcast %621 : vector<8x1xf32> to vector<8x32xf32>
    %623 = arith.mulf %622, %609 : vector<8x32xf32>
    %624 = tpu.reciprocal %615 {approx = true} : vector<8x1xf32> -> vector<8x1xf32>
    %625 = vector.broadcast %624 : vector<8x1xf32> to vector<8x32xf32>
    %626 = arith.mulf %623, %625 : vector<8x32xf32>
    %627 = arith.mulf %626, %626 : vector<8x32xf32>
    %cst_190 = arith.constant dense<0.000000e+00> : vector<8xf32>
    %628 = vector.multi_reduction <add>, %627, %cst_190 [1] : vector<8x32xf32> to vector<8xf32>
    %629 = vector.shape_cast %628 : vector<8xf32> to vector<8x1xf32>
    %630 = math.sqrt %629 : vector<8x1xf32>
    %cst_191 = arith.constant 0.999989986 : f32
    %631 = vector.broadcast %cst_191 : f32 to vector<8x1xf32>
    %632 = arith.cmpf ogt, %630, %631 : vector<8x1xf32>
    %cst_192 = arith.constant 1.000000e-15 : f32
    %633 = vector.broadcast %cst_192 : f32 to vector<8x1xf32>
    %634 = arith.maximumf %630, %633 : vector<8x1xf32>
    %635 = tpu.reciprocal %634 {approx = true} : vector<8x1xf32> -> vector<8x1xf32>
    %cst_193 = arith.constant 0.999989986 : f32
    %636 = vector.broadcast %cst_193 : f32 to vector<8x1xf32>
    %637 = arith.mulf %636, %635 : vector<8x1xf32>
    %cst_194 = arith.constant 1.000000e+00 : f32
    %638 = vector.broadcast %cst_194 : f32 to vector<8x1xf32>
    %639 = arith.select %632, %637, %638 : vector<8x1xi1>, vector<8x1xf32>
    %640 = vector.broadcast %639 : vector<8x1xf32> to vector<8x32xf32>
    %641 = arith.mulf %626, %640 : vector<8x32xf32>
    %642 = arith.mulf %641, %216 : vector<8x32xf32>
    %cst_195 = arith.constant dense<0.000000e+00> : vector<8xf32>
    %643 = vector.multi_reduction <add>, %642, %cst_195 [1] : vector<8x32xf32> to vector<8xf32>
    %644 = vector.shape_cast %643 : vector<8xf32> to vector<8x1xf32>
    %645 = arith.mulf %641, %641 : vector<8x32xf32>
    %cst_196 = arith.constant dense<0.000000e+00> : vector<8xf32>
    %646 = vector.multi_reduction <add>, %645, %cst_196 [1] : vector<8x32xf32> to vector<8xf32>
    %647 = vector.shape_cast %646 : vector<8xf32> to vector<8x1xf32>
    %648 = arith.mulf %216, %216 : vector<8x32xf32>
    %cst_197 = arith.constant dense<0.000000e+00> : vector<8xf32>
    %649 = vector.multi_reduction <add>, %648, %cst_197 [1] : vector<8x32xf32> to vector<8xf32>
    %650 = vector.shape_cast %649 : vector<8xf32> to vector<8x1xf32>
    %cst_198 = arith.constant 2.000000e+00 : f32
    %651 = vector.broadcast %cst_198 : f32 to vector<8x1xf32>
    %652 = arith.mulf %651, %644 : vector<8x1xf32>
    %cst_199 = arith.constant 1.000000e+00 : f32
    %653 = vector.broadcast %cst_199 : f32 to vector<8x1xf32>
    %654 = arith.addf %653, %652 : vector<8x1xf32>
    %655 = arith.addf %654, %650 : vector<8x1xf32>
    %656 = vector.broadcast %655 : vector<8x1xf32> to vector<8x32xf32>
    %657 = arith.mulf %656, %641 : vector<8x32xf32>
    %cst_200 = arith.constant 1.000000e+00 : f32
    %658 = vector.broadcast %cst_200 : f32 to vector<8x1xf32>
    %659 = arith.subf %658, %647 : vector<8x1xf32>
    %660 = vector.broadcast %659 : vector<8x1xf32> to vector<8x32xf32>
    %661 = arith.mulf %660, %216 : vector<8x32xf32>
    %662 = arith.addf %657, %661 : vector<8x32xf32>
    %cst_201 = arith.constant 2.000000e+00 : f32
    %663 = vector.broadcast %cst_201 : f32 to vector<8x1xf32>
    %664 = arith.mulf %663, %644 : vector<8x1xf32>
    %cst_202 = arith.constant 1.000000e+00 : f32
    %665 = vector.broadcast %cst_202 : f32 to vector<8x1xf32>
    %666 = arith.addf %665, %664 : vector<8x1xf32>
    %667 = arith.mulf %647, %650 : vector<8x1xf32>
    %668 = arith.addf %666, %667 : vector<8x1xf32>
    %cst_203 = arith.constant 1.000000e-15 : f32
    %669 = vector.broadcast %cst_203 : f32 to vector<8x1xf32>
    %670 = arith.maximumf %668, %669 : vector<8x1xf32>
    %671 = tpu.reciprocal %670 {approx = true} : vector<8x1xf32> -> vector<8x1xf32>
    %672 = vector.broadcast %671 : vector<8x1xf32> to vector<8x32xf32>
    %673 = arith.mulf %662, %672 : vector<8x32xf32>
    %674 = arith.mulf %673, %673 : vector<8x32xf32>
    %cst_204 = arith.constant dense<0.000000e+00> : vector<8xf32>
    %675 = vector.multi_reduction <add>, %674, %cst_204 [1] : vector<8x32xf32> to vector<8xf32>
    %676 = vector.shape_cast %675 : vector<8xf32> to vector<8x1xf32>
    %677 = math.sqrt %676 : vector<8x1xf32>
    %cst_205 = arith.constant 0.999989986 : f32
    %678 = vector.broadcast %cst_205 : f32 to vector<8x1xf32>
    %679 = arith.cmpf ogt, %677, %678 : vector<8x1xf32>
    %cst_206 = arith.constant 1.000000e-15 : f32
    %680 = vector.broadcast %cst_206 : f32 to vector<8x1xf32>
    %681 = arith.maximumf %677, %680 : vector<8x1xf32>
    %682 = tpu.reciprocal %681 {approx = true} : vector<8x1xf32> -> vector<8x1xf32>
    %cst_207 = arith.constant 0.999989986 : f32
    %683 = vector.broadcast %cst_207 : f32 to vector<8x1xf32>
    %684 = arith.mulf %683, %682 : vector<8x1xf32>
    %cst_208 = arith.constant 1.000000e+00 : f32
    %685 = vector.broadcast %cst_208 : f32 to vector<8x1xf32>
    %686 = arith.select %679, %684, %685 : vector<8x1xi1>, vector<8x1xf32>
    %687 = vector.broadcast %686 : vector<8x1xf32> to vector<8x32xf32>
    %688 = arith.mulf %673, %687 : vector<8x32xf32>
    %689 = vector.broadcast %8 : vector<1x32xf32> to vector<8x32xf32>
    %690 = arith.mulf %688, %689 : vector<8x32xf32>
    %cst_209 = arith.constant dense<0.000000e+00> : vector<8xf32>
    %691 = vector.multi_reduction <add>, %690, %cst_209 [1] : vector<8x32xf32> to vector<8xf32>
    %692 = vector.shape_cast %691 : vector<8xf32> to vector<8x1xf32>
    %693 = arith.mulf %688, %688 : vector<8x32xf32>
    %cst_210 = arith.constant dense<0.000000e+00> : vector<8xf32>
    %694 = vector.multi_reduction <add>, %693, %cst_210 [1] : vector<8x32xf32> to vector<8xf32>
    %695 = vector.shape_cast %694 : vector<8xf32> to vector<8x1xf32>
    %696 = arith.mulf %8, %8 : vector<1x32xf32>
    %cst_211 = arith.constant dense<0.000000e+00> : vector<1xf32>
    %697 = vector.multi_reduction <add>, %696, %cst_211 [1] : vector<1x32xf32> to vector<1xf32>
    %698 = vector.shape_cast %697 : vector<1xf32> to vector<1x1xf32>
    %cst_212 = arith.constant 2.000000e+00 : f32
    %699 = vector.broadcast %cst_212 : f32 to vector<8x1xf32>
    %700 = arith.mulf %699, %692 : vector<8x1xf32>
    %cst_213 = arith.constant 1.000000e+00 : f32
    %701 = vector.broadcast %cst_213 : f32 to vector<8x1xf32>
    %702 = arith.addf %701, %700 : vector<8x1xf32>
    %703 = vector.broadcast %698 : vector<1x1xf32> to vector<8x1xf32>
    %704 = arith.addf %702, %703 : vector<8x1xf32>
    %705 = vector.broadcast %704 : vector<8x1xf32> to vector<8x32xf32>
    %706 = arith.mulf %705, %688 : vector<8x32xf32>
    %cst_214 = arith.constant 1.000000e+00 : f32
    %707 = vector.broadcast %cst_214 : f32 to vector<8x1xf32>
    %708 = arith.subf %707, %695 : vector<8x1xf32>
    %709 = vector.broadcast %708 : vector<8x1xf32> to vector<8x32xf32>
    %710 = vector.broadcast %8 : vector<1x32xf32> to vector<8x32xf32>
    %711 = arith.mulf %709, %710 : vector<8x32xf32>
    %712 = arith.addf %706, %711 : vector<8x32xf32>
    %cst_215 = arith.constant 2.000000e+00 : f32
    %713 = vector.broadcast %cst_215 : f32 to vector<8x1xf32>
    %714 = arith.mulf %713, %692 : vector<8x1xf32>
    %cst_216 = arith.constant 1.000000e+00 : f32
    %715 = vector.broadcast %cst_216 : f32 to vector<8x1xf32>
    %716 = arith.addf %715, %714 : vector<8x1xf32>
    %717 = vector.broadcast %698 : vector<1x1xf32> to vector<8x1xf32>
    %718 = arith.mulf %695, %717 : vector<8x1xf32>
    %719 = arith.addf %716, %718 : vector<8x1xf32>
    %cst_217 = arith.constant 1.000000e-15 : f32
    %720 = vector.broadcast %cst_217 : f32 to vector<8x1xf32>
    %721 = arith.maximumf %719, %720 : vector<8x1xf32>
    %722 = tpu.reciprocal %721 {approx = true} : vector<8x1xf32> -> vector<8x1xf32>
    %723 = vector.broadcast %722 : vector<8x1xf32> to vector<8x32xf32>
    %724 = arith.mulf %712, %723 : vector<8x32xf32>
    %725 = arith.mulf %724, %724 : vector<8x32xf32>
    %cst_218 = arith.constant dense<0.000000e+00> : vector<8xf32>
    %726 = vector.multi_reduction <add>, %725, %cst_218 [1] : vector<8x32xf32> to vector<8xf32>
    %727 = vector.shape_cast %726 : vector<8xf32> to vector<8x1xf32>
    %728 = math.sqrt %727 : vector<8x1xf32>
    %cst_219 = arith.constant 0.999989986 : f32
    %729 = vector.broadcast %cst_219 : f32 to vector<8x1xf32>
    %730 = arith.cmpf ogt, %728, %729 : vector<8x1xf32>
    %cst_220 = arith.constant 1.000000e-15 : f32
    %731 = vector.broadcast %cst_220 : f32 to vector<8x1xf32>
    %732 = arith.maximumf %728, %731 : vector<8x1xf32>
    %733 = tpu.reciprocal %732 {approx = true} : vector<8x1xf32> -> vector<8x1xf32>
    %cst_221 = arith.constant 0.999989986 : f32
    %734 = vector.broadcast %cst_221 : f32 to vector<8x1xf32>
    %735 = arith.mulf %734, %733 : vector<8x1xf32>
    %cst_222 = arith.constant 1.000000e+00 : f32
    %736 = vector.broadcast %cst_222 : f32 to vector<8x1xf32>
    %737 = arith.select %730, %735, %736 : vector<8x1xi1>, vector<8x1xf32>
    %738 = vector.broadcast %737 : vector<8x1xf32> to vector<8x32xf32>
    %739 = arith.mulf %724, %738 : vector<8x32xf32>
    %cst_223 = arith.constant 0.000000e+00 : f32
    %740 = vector.broadcast %cst_223 : f32 to vector<8x32xf32>
    %741 = arith.subf %740, %1 : vector<8x32xf32>
    %742 = arith.mulf %741, %739 : vector<8x32xf32>
    %cst_224 = arith.constant dense<0.000000e+00> : vector<8xf32>
    %743 = vector.multi_reduction <add>, %742, %cst_224 [1] : vector<8x32xf32> to vector<8xf32>
    %744 = vector.shape_cast %743 : vector<8xf32> to vector<8x1xf32>
    %745 = arith.mulf %741, %741 : vector<8x32xf32>
    %cst_225 = arith.constant dense<0.000000e+00> : vector<8xf32>
    %746 = vector.multi_reduction <add>, %745, %cst_225 [1] : vector<8x32xf32> to vector<8xf32>
    %747 = vector.shape_cast %746 : vector<8xf32> to vector<8x1xf32>
    %748 = arith.mulf %739, %739 : vector<8x32xf32>
    %cst_226 = arith.constant dense<0.000000e+00> : vector<8xf32>
    %749 = vector.multi_reduction <add>, %748, %cst_226 [1] : vector<8x32xf32> to vector<8xf32>
    %750 = vector.shape_cast %749 : vector<8xf32> to vector<8x1xf32>
    %cst_227 = arith.constant 2.000000e+00 : f32
    %751 = vector.broadcast %cst_227 : f32 to vector<8x1xf32>
    %752 = arith.mulf %751, %744 : vector<8x1xf32>
    %cst_228 = arith.constant 1.000000e+00 : f32
    %753 = vector.broadcast %cst_228 : f32 to vector<8x1xf32>
    %754 = arith.addf %753, %752 : vector<8x1xf32>
    %755 = arith.addf %754, %750 : vector<8x1xf32>
    %756 = vector.broadcast %755 : vector<8x1xf32> to vector<8x32xf32>
    %757 = arith.mulf %756, %741 : vector<8x32xf32>
    %cst_229 = arith.constant 1.000000e+00 : f32
    %758 = vector.broadcast %cst_229 : f32 to vector<8x1xf32>
    %759 = arith.subf %758, %747 : vector<8x1xf32>
    %760 = vector.broadcast %759 : vector<8x1xf32> to vector<8x32xf32>
    %761 = arith.mulf %760, %739 : vector<8x32xf32>
    %762 = arith.addf %757, %761 : vector<8x32xf32>
    %cst_230 = arith.constant 2.000000e+00 : f32
    %763 = vector.broadcast %cst_230 : f32 to vector<8x1xf32>
    %764 = arith.mulf %763, %744 : vector<8x1xf32>
    %cst_231 = arith.constant 1.000000e+00 : f32
    %765 = vector.broadcast %cst_231 : f32 to vector<8x1xf32>
    %766 = arith.addf %765, %764 : vector<8x1xf32>
    %767 = arith.mulf %747, %750 : vector<8x1xf32>
    %768 = arith.addf %766, %767 : vector<8x1xf32>
    %cst_232 = arith.constant 1.000000e-15 : f32
    %769 = vector.broadcast %cst_232 : f32 to vector<8x1xf32>
    %770 = arith.maximumf %768, %769 : vector<8x1xf32>
    %771 = tpu.reciprocal %770 {approx = true} : vector<8x1xf32> -> vector<8x1xf32>
    %772 = vector.broadcast %771 : vector<8x1xf32> to vector<8x32xf32>
    %773 = arith.mulf %762, %772 : vector<8x32xf32>
    %774 = arith.mulf %773, %773 : vector<8x32xf32>
    %cst_233 = arith.constant dense<0.000000e+00> : vector<8xf32>
    %775 = vector.multi_reduction <add>, %774, %cst_233 [1] : vector<8x32xf32> to vector<8xf32>
    %776 = vector.shape_cast %775 : vector<8xf32> to vector<8x1xf32>
    %777 = math.sqrt %776 : vector<8x1xf32>
    %cst_234 = arith.constant 0.999989986 : f32
    %778 = vector.broadcast %cst_234 : f32 to vector<8x1xf32>
    %779 = arith.cmpf ogt, %777, %778 : vector<8x1xf32>
    %cst_235 = arith.constant 1.000000e-15 : f32
    %780 = vector.broadcast %cst_235 : f32 to vector<8x1xf32>
    %781 = arith.maximumf %777, %780 : vector<8x1xf32>
    %782 = tpu.reciprocal %781 {approx = true} : vector<8x1xf32> -> vector<8x1xf32>
    %cst_236 = arith.constant 0.999989986 : f32
    %783 = vector.broadcast %cst_236 : f32 to vector<8x1xf32>
    %784 = arith.mulf %783, %782 : vector<8x1xf32>
    %cst_237 = arith.constant 1.000000e+00 : f32
    %785 = vector.broadcast %cst_237 : f32 to vector<8x1xf32>
    %786 = arith.select %779, %784, %785 : vector<8x1xi1>, vector<8x1xf32>
    %787 = vector.broadcast %786 : vector<8x1xf32> to vector<8x32xf32>
    %788 = arith.mulf %773, %787 : vector<8x32xf32>
    %789 = arith.mulf %788, %788 : vector<8x32xf32>
    %cst_238 = arith.constant dense<0.000000e+00> : vector<8xf32>
    %790 = vector.multi_reduction <add>, %789, %cst_238 [1] : vector<8x32xf32> to vector<8xf32>
    %791 = vector.shape_cast %790 : vector<8xf32> to vector<8x1xf32>
    %792 = math.sqrt %791 : vector<8x1xf32>
    %cst_239 = arith.constant 0.999989986 : f32
    %793 = vector.broadcast %cst_239 : f32 to vector<8x1xf32>
    %794 = arith.cmpf ogt, %792, %793 : vector<8x1xf32>
    %cst_240 = arith.constant 1.000000e-15 : f32
    %795 = vector.broadcast %cst_240 : f32 to vector<8x1xf32>
    %796 = arith.maximumf %792, %795 : vector<8x1xf32>
    %797 = tpu.reciprocal %796 {approx = true} : vector<8x1xf32> -> vector<8x1xf32>
    %cst_241 = arith.constant 0.999989986 : f32
    %798 = vector.broadcast %cst_241 : f32 to vector<8x1xf32>
    %799 = arith.mulf %798, %797 : vector<8x1xf32>
    %cst_242 = arith.constant 1.000000e+00 : f32
    %800 = vector.broadcast %cst_242 : f32 to vector<8x1xf32>
    %801 = arith.select %794, %799, %800 : vector<8x1xi1>, vector<8x1xf32>
    %802 = vector.broadcast %801 : vector<8x1xf32> to vector<8x32xf32>
    %803 = arith.mulf %788, %802 : vector<8x32xf32>
    %804 = arith.mulf %803, %803 : vector<8x32xf32>
    %cst_243 = arith.constant dense<0.000000e+00> : vector<8xf32>
    %805 = vector.multi_reduction <add>, %804, %cst_243 [1] : vector<8x32xf32> to vector<8xf32>
    %806 = vector.shape_cast %805 : vector<8xf32> to vector<8x1xf32>
    %807 = math.sqrt %806 : vector<8x1xf32>
    %cst_244 = arith.constant 1.000000e-15 : f32
    %808 = vector.broadcast %cst_244 : f32 to vector<8x1xf32>
    %809 = arith.maximumf %807, %808 : vector<8x1xf32>
    %cst_245 = arith.constant 0.000000e+00 : f32
    %cst_246 = arith.constant 0.99999988 : f32
    %810 = vector.broadcast %cst_245 : f32 to vector<8x1xf32>
    %811 = arith.maximumf %810, %809 : vector<8x1xf32>
    %812 = vector.broadcast %cst_246 : f32 to vector<8x1xf32>
    %813 = arith.minimumf %812, %811 : vector<8x1xf32>
    %cst_247 = arith.constant 1.000000e+00 : f32
    %814 = vector.broadcast %cst_247 : f32 to vector<8x1xf32>
    %815 = arith.addf %814, %813 : vector<8x1xf32>
    %cst_248 = arith.constant 1.000000e+00 : f32
    %816 = vector.broadcast %cst_248 : f32 to vector<8x1xf32>
    %817 = arith.subf %816, %813 : vector<8x1xf32>
    %818 = arith.divf %815, %817 : vector<8x1xf32>
    %819 = math.log %818 : vector<8x1xf32>
    %cst_249 = arith.constant 5.000000e-01 : f32
    %820 = vector.broadcast %cst_249 : f32 to vector<8x1xf32>
    %821 = arith.mulf %820, %819 : vector<8x1xf32>
    %822 = tpu.reciprocal %809 {approx = true} : vector<8x1xf32> -> vector<8x1xf32>
    %823 = arith.mulf %821, %822 : vector<8x1xf32>
    %824 = arith.mulf %803, %378 : vector<8x32xf32>
    %825 = arith.mulf %824, %824 : vector<8x32xf32>
    %cst_250 = arith.constant dense<0.000000e+00> : vector<8xf32>
    %826 = vector.multi_reduction <add>, %825, %cst_250 [1] : vector<8x32xf32> to vector<8xf32>
    %827 = vector.shape_cast %826 : vector<8xf32> to vector<8x1xf32>
    %828 = math.sqrt %827 : vector<8x1xf32>
    %cst_251 = arith.constant 1.000000e-15 : f32
    %829 = vector.broadcast %cst_251 : f32 to vector<8x1xf32>
    %830 = arith.maximumf %828, %829 : vector<8x1xf32>
    %831 = arith.mulf %830, %823 : vector<8x1xf32>
    %cst_252 = arith.constant -1.500000e+01 : f32
    %cst_253 = arith.constant 1.500000e+01 : f32
    %832 = vector.broadcast %cst_252 : f32 to vector<8x1xf32>
    %833 = arith.maximumf %832, %831 : vector<8x1xf32>
    %834 = vector.broadcast %cst_253 : f32 to vector<8x1xf32>
    %835 = arith.minimumf %834, %833 : vector<8x1xf32>
    %836 = math.tanh %835 : vector<8x1xf32>
    %837 = vector.broadcast %836 : vector<8x1xf32> to vector<8x32xf32>
    %838 = arith.mulf %837, %824 : vector<8x32xf32>
    %839 = tpu.reciprocal %830 {approx = true} : vector<8x1xf32> -> vector<8x1xf32>
    %840 = vector.broadcast %839 : vector<8x1xf32> to vector<8x32xf32>
    %841 = arith.mulf %838, %840 : vector<8x32xf32>
    %842 = arith.mulf %841, %841 : vector<8x32xf32>
    %cst_254 = arith.constant dense<0.000000e+00> : vector<8xf32>
    %843 = vector.multi_reduction <add>, %842, %cst_254 [1] : vector<8x32xf32> to vector<8xf32>
    %844 = vector.shape_cast %843 : vector<8xf32> to vector<8x1xf32>
    %845 = math.sqrt %844 : vector<8x1xf32>
    %cst_255 = arith.constant 0.999989986 : f32
    %846 = vector.broadcast %cst_255 : f32 to vector<8x1xf32>
    %847 = arith.cmpf ogt, %845, %846 : vector<8x1xf32>
    %cst_256 = arith.constant 1.000000e-15 : f32
    %848 = vector.broadcast %cst_256 : f32 to vector<8x1xf32>
    %849 = arith.maximumf %845, %848 : vector<8x1xf32>
    %850 = tpu.reciprocal %849 {approx = true} : vector<8x1xf32> -> vector<8x1xf32>
    %cst_257 = arith.constant 0.999989986 : f32
    %851 = vector.broadcast %cst_257 : f32 to vector<8x1xf32>
    %852 = arith.mulf %851, %850 : vector<8x1xf32>
    %cst_258 = arith.constant 1.000000e+00 : f32
    %853 = vector.broadcast %cst_258 : f32 to vector<8x1xf32>
    %854 = arith.select %847, %852, %853 : vector<8x1xi1>, vector<8x1xf32>
    %855 = vector.broadcast %854 : vector<8x1xf32> to vector<8x32xf32>
    %856 = arith.mulf %841, %855 : vector<8x32xf32>
    %857 = arith.mulf %1, %856 : vector<8x32xf32>
    %cst_259 = arith.constant dense<0.000000e+00> : vector<8xf32>
    %858 = vector.multi_reduction <add>, %857, %cst_259 [1] : vector<8x32xf32> to vector<8xf32>
    %859 = vector.shape_cast %858 : vector<8xf32> to vector<8x1xf32>
    %860 = arith.mulf %1, %1 : vector<8x32xf32>
    %cst_260 = arith.constant dense<0.000000e+00> : vector<8xf32>
    %861 = vector.multi_reduction <add>, %860, %cst_260 [1] : vector<8x32xf32> to vector<8xf32>
    %862 = vector.shape_cast %861 : vector<8xf32> to vector<8x1xf32>
    %863 = arith.mulf %856, %856 : vector<8x32xf32>
    %cst_261 = arith.constant dense<0.000000e+00> : vector<8xf32>
    %864 = vector.multi_reduction <add>, %863, %cst_261 [1] : vector<8x32xf32> to vector<8xf32>
    %865 = vector.shape_cast %864 : vector<8xf32> to vector<8x1xf32>
    %cst_262 = arith.constant 2.000000e+00 : f32
    %866 = vector.broadcast %cst_262 : f32 to vector<8x1xf32>
    %867 = arith.mulf %866, %859 : vector<8x1xf32>
    %cst_263 = arith.constant 1.000000e+00 : f32
    %868 = vector.broadcast %cst_263 : f32 to vector<8x1xf32>
    %869 = arith.addf %868, %867 : vector<8x1xf32>
    %870 = arith.addf %869, %865 : vector<8x1xf32>
    %871 = vector.broadcast %870 : vector<8x1xf32> to vector<8x32xf32>
    %872 = arith.mulf %871, %1 : vector<8x32xf32>
    %cst_264 = arith.constant 1.000000e+00 : f32
    %873 = vector.broadcast %cst_264 : f32 to vector<8x1xf32>
    %874 = arith.subf %873, %862 : vector<8x1xf32>
    %875 = vector.broadcast %874 : vector<8x1xf32> to vector<8x32xf32>
    %876 = arith.mulf %875, %856 : vector<8x32xf32>
    %877 = arith.addf %872, %876 : vector<8x32xf32>
    %cst_265 = arith.constant 2.000000e+00 : f32
    %878 = vector.broadcast %cst_265 : f32 to vector<8x1xf32>
    %879 = arith.mulf %878, %859 : vector<8x1xf32>
    %cst_266 = arith.constant 1.000000e+00 : f32
    %880 = vector.broadcast %cst_266 : f32 to vector<8x1xf32>
    %881 = arith.addf %880, %879 : vector<8x1xf32>
    %882 = arith.mulf %862, %865 : vector<8x1xf32>
    %883 = arith.addf %881, %882 : vector<8x1xf32>
    %cst_267 = arith.constant 1.000000e-15 : f32
    %884 = vector.broadcast %cst_267 : f32 to vector<8x1xf32>
    %885 = arith.maximumf %883, %884 : vector<8x1xf32>
    %886 = tpu.reciprocal %885 {approx = true} : vector<8x1xf32> -> vector<8x1xf32>
    %887 = vector.broadcast %886 : vector<8x1xf32> to vector<8x32xf32>
    %888 = arith.mulf %877, %887 : vector<8x32xf32>
    %889 = arith.mulf %888, %888 : vector<8x32xf32>
    %cst_268 = arith.constant dense<0.000000e+00> : vector<8xf32>
    %890 = vector.multi_reduction <add>, %889, %cst_268 [1] : vector<8x32xf32> to vector<8xf32>
    %891 = vector.shape_cast %890 : vector<8xf32> to vector<8x1xf32>
    %892 = math.sqrt %891 : vector<8x1xf32>
    %cst_269 = arith.constant 0.999989986 : f32
    %893 = vector.broadcast %cst_269 : f32 to vector<8x1xf32>
    %894 = arith.cmpf ogt, %892, %893 : vector<8x1xf32>
    %cst_270 = arith.constant 1.000000e-15 : f32
    %895 = vector.broadcast %cst_270 : f32 to vector<8x1xf32>
    %896 = arith.maximumf %892, %895 : vector<8x1xf32>
    %897 = tpu.reciprocal %896 {approx = true} : vector<8x1xf32> -> vector<8x1xf32>
    %cst_271 = arith.constant 0.999989986 : f32
    %898 = vector.broadcast %cst_271 : f32 to vector<8x1xf32>
    %899 = arith.mulf %898, %897 : vector<8x1xf32>
    %cst_272 = arith.constant 1.000000e+00 : f32
    %900 = vector.broadcast %cst_272 : f32 to vector<8x1xf32>
    %901 = arith.select %894, %899, %900 : vector<8x1xi1>, vector<8x1xf32>
    %902 = vector.broadcast %901 : vector<8x1xf32> to vector<8x32xf32>
    %903 = arith.mulf %888, %902 : vector<8x32xf32>
    %c0_273 = arith.constant 0 : index
    %c0_274 = arith.constant 0 : index
    %904 = vector.load %arg6[%c0_273, %c0_274] : memref<8x32xf32, #tpu.memory_space<vmem>>, vector<8x32xf32>
    tpu.vector_store %arg6[%c0_273, %c0_274], %903 {strides = array<i32>} : memref<8x32xf32, #tpu.memory_space<vmem>>, vector<8x32xf32>,
    return
  }
}

</mosaic_0001>

<llo_original>
// kernel: tpu_custom_call.1
$region0: #{tpu_custom_call.1}
  #allocation0 [shape = 'u32[]', space=smem, size = 0x4, offset = 0x4, fixed_abs, tag = 'smem constant byte address 0x4 - core index']
  #allocation1 [shape = 'u32[72,128]{1,0:T(1,128)}', space=vmem, size = 0x9000, scoped, tag = 'internal scratch']
  %s0 = inlined_call_operand.hbm [shape: f32[8,32], index: 0, kind: input, shape index: {}]
  %s1 = inlined_call_operand.hbm [shape: f32[8,32], index: 1, kind: input, shape index: {}]
  %s2 = inlined_call_operand.hbm [shape: f32[32,64], index: 2, kind: input, shape index: {}]
  %s3 = inlined_call_operand.hbm [shape: f32[32,64], index: 3, kind: input, shape index: {}]
  %s4 = inlined_call_operand.hbm [shape: f32[32,32], index: 4, kind: input, shape index: {}]
  %s5 = inlined_call_operand.hbm [shape: f32[8,32], index: 5, kind: input, shape index: {}]
  %s6 = inlined_call_operand.hbm [shape: f32[8,32], index: 6, kind: output, shape index: {}]
  %s7 = sld [smem:[#allocation0]]
  $region58: #{tpu_custom_call.1} parent=0
    _
  %s9 = ssub.s32 1, %s7
  %s10 = scalar_select 0, %s9, %s7
  $region1: #{tpu_custom_call.1} parent=0
    #allocation2 [shape = 'u8[4096]{0}', space=vmem, size = 0x1000, scoped, tag = 'input window, operand 0, single buffered']
    #allocation3 [shape = 's32[1]{0}', space=sflag, size = 0x4, scoped, tag = 'scoped memory for tpu_custom_call.1']
    #allocation4 [shape = 's32[1]{0}', space=sflag, size = 0x4, scoped, tag = 'scoped memory for tpu_custom_call.1']
    #allocation5 [shape = 'u8[4096]{0}', space=vmem, size = 0x1000, scoped, tag = 'input window, operand 1, single buffered']
    #allocation6 [shape = 's32[1]{0}', space=sflag, size = 0x4, scoped, tag = 'scoped memory for tpu_custom_call.1']
    #allocation7 [shape = 'u8[16384]{0}', space=vmem, size = 0x4000, scoped, tag = 'input window, operand 2, single buffered']
    #allocation8 [shape = 'u8[16384]{0}', space=vmem, size = 0x4000, scoped, tag = 'input window, operand 3, single buffered']
    #allocation9 [shape = 's32[1]{0}', space=sflag, size = 0x4, scoped, tag = 'scoped memory for tpu_custom_call.1']
    #allocation10 [shape = 'u8[16384]{0}', space=vmem, size = 0x4000, scoped, tag = 'input window, operand 4, single buffered']
    #allocation11 [shape = 'u8[4096]{0}', space=vmem, size = 0x1000, scoped, tag = 'input window, operand 5, single buffered']
    #allocation12 [shape = 's32[1]{0}', space=sflag, size = 0x4, scoped, tag = 'scoped memory for tpu_custom_call.1']
    #allocation13 [shape = 'u8[4096]{0}', space=vmem, size = 0x1000, scoped, tag = 'output window, operand 0, single buffered']
    %11 = vsyncpa [#allocation3], 0
    %12 = vsyncpa [#allocation6], 0
    %13 = vsyncpa [#allocation9], 0
    %14 = vsyncpa [#allocation12], 0
    %15 = vsyncpa [#allocation4], 0
    // Predicated region
    $region2: #{tpu_custom_call.1} parent=1 // pred_check
      _
    $region3: #{tpu_custom_call.1} parent=1 // pred_check_branch
      %17 = sbr.rel (0) target = $region5
    $region4: #{tpu_custom_call.1} parent=1 // pred_region
      %19 = vsyncadd [#allocation3], 0
      %s21 = sshll.u32 %s0, 4
      %s22 = int_to_ptr.hbm [resolvable:$true] %s21
      %s23 = sshll.u32 [#allocation2], 4
      %s24 = int_to_ptr.vmem [resolvable:$true] %s23
      %26 = dma.hbm_to_vmem [thread:$0]  %s22, 128, %s24, [#allocation3]
    $region5: #{tpu_custom_call.1} parent=1 // pred_fallthru
      _
    // Predicated region
    $region6: #{tpu_custom_call.1} parent=1 // pred_check
      _
    $region7: #{tpu_custom_call.1} parent=1 // pred_check_branch
      %28 = sbr.rel (0) target = $region9
    $region8: #{tpu_custom_call.1} parent=1 // pred_region
      %30 = vsyncadd [#allocation6], 0
      %s32 = sshll.u32 %s1, 4
      %s33 = int_to_ptr.hbm [resolvable:$true] %s32
      %s34 = sshll.u32 [#allocation5], 4
      %s35 = int_to_ptr.vmem [resolvable:$true] %s34
      %37 = dma.hbm_to_vmem [thread:$0]  %s33, 128, %s35, [#allocation6]
    $region9: #{tpu_custom_call.1} parent=1 // pred_fallthru
      _
    // Predicated region
    $region10: #{tpu_custom_call.1} parent=1 // pred_check
      _
    $region11: #{tpu_custom_call.1} parent=1 // pred_check_branch
      %39 = sbr.rel (0) target = $region13
    $region12: #{tpu_custom_call.1} parent=1 // pred_region
      %41 = vsyncadd [#allocation6], 0
      %s42 = sshll.u32 %s2, 4
      %s43 = int_to_ptr.hbm [resolvable:$true] %s42
      %s44 = sshll.u32 [#allocation7], 4
      %s45 = int_to_ptr.vmem [resolvable:$true] %s44
      %50 = dma.hbm_to_vmem [thread:$0]  %s43, 512, %s45, [#allocation6], 128, 128, 8
    $region13: #{tpu_custom_call.1} parent=1 // pred_fallthru
      _
    // Predicated region
    $region14: #{tpu_custom_call.1} parent=1 // pred_check
      _
    $region15: #{tpu_custom_call.1} parent=1 // pred_check_branch
      %52 = sbr.rel (0) target = $region17
    $region16: #{tpu_custom_call.1} parent=1 // pred_region
      %54 = vsyncadd [#allocation9], 0
      %s55 = sshll.u32 %s3, 4
      %s56 = int_to_ptr.hbm [resolvable:$true] %s55
      %s57 = sshll.u32 [#allocation8], 4
      %s58 = int_to_ptr.vmem [resolvable:$true] %s57
      %63 = dma.hbm_to_vmem [thread:$0]  %s56, 512, %s58, [#allocation9], 128, 128, 8
    $region17: #{tpu_custom_call.1} parent=1 // pred_fallthru
      _
    // Predicated region
    $region18: #{tpu_custom_call.1} parent=1 // pred_check
      _
    $region19: #{tpu_custom_call.1} parent=1 // pred_check_branch
      %65 = sbr.rel (0) target = $region21
    $region20: #{tpu_custom_call.1} parent=1 // pred_region
      %67 = vsyncadd [#allocation9], 0
      %s68 = sshll.u32 %s4, 4
      %s69 = int_to_ptr.hbm [resolvable:$true] %s68
      %s70 = sshll.u32 [#allocation10], 4
      %s71 = int_to_ptr.vmem [resolvable:$true] %s70
      %76 = dma.hbm_to_vmem [thread:$0]  %s69, 512, %s71, [#allocation9], 128, 128, 8
    $region21: #{tpu_custom_call.1} parent=1 // pred_fallthru
      _
    // Predicated region
    $region22: #{tpu_custom_call.1} parent=1 // pred_check
      _
    $region23: #{tpu_custom_call.1} parent=1 // pred_check_branch
      %78 = sbr.rel (0) target = $region25
    $region24: #{tpu_custom_call.1} parent=1 // pred_region
      %80 = vsyncadd [#allocation12], 0
      %s82 = sshll.u32 %s5, 4
      %s83 = int_to_ptr.hbm [resolvable:$true] %s82
      %s84 = sshll.u32 [#allocation11], 4
      %s85 = int_to_ptr.vmem [resolvable:$true] %s84
      %87 = dma.hbm_to_vmem [thread:$0]  %s83, 128, %s85, [#allocation12]
    $region25: #{tpu_custom_call.1} parent=1 // pred_fallthru
      _
    // Predicated region
    $region26: #{tpu_custom_call.1} parent=1 // pred_check
      _
    $region27: #{tpu_custom_call.1} parent=1 // pred_check_branch
      %89 = sbr.rel (0) target = $region29
    $region28: #{tpu_custom_call.1} parent=1 // pred_region
      %91 = dma.done [#allocation3], 128
    $region29: #{tpu_custom_call.1} parent=1 // pred_fallthru
      _
    // Predicated region
    $region30: #{tpu_custom_call.1} parent=1 // pred_check
      _
    $region31: #{tpu_custom_call.1} parent=1 // pred_check_branch
      %93 = sbr.rel (0) target = $region33
    $region32: #{tpu_custom_call.1} parent=1 // pred_region
      %95 = dma.done [#allocation6], 128
    $region33: #{tpu_custom_call.1} parent=1 // pred_fallthru
      _
    // Predicated region
    $region34: #{tpu_custom_call.1} parent=1 // pred_check
      _
    $region35: #{tpu_custom_call.1} parent=1 // pred_check_branch
      %97 = sbr.rel (0) target = $region37
    $region36: #{tpu_custom_call.1} parent=1 // pred_region
      %99 = dma.done [#allocation6], 512
    $region37: #{tpu_custom_call.1} parent=1 // pred_fallthru
      _
    // Predicated region
    $region38: #{tpu_custom_call.1} parent=1 // pred_check
      _
    $region39: #{tpu_custom_call.1} parent=1 // pred_check_branch
      %101 = sbr.rel (0) target = $region41
    $region40: #{tpu_custom_call.1} parent=1 // pred_region
      %103 = dma.done [#allocation9], 512
    $region41: #{tpu_custom_call.1} parent=1 // pred_fallthru
      _
    // Predicated region
    $region42: #{tpu_custom_call.1} parent=1 // pred_check
      _
    $region43: #{tpu_custom_call.1} parent=1 // pred_check_branch
      %105 = sbr.rel (0) target = $region45
    $region44: #{tpu_custom_call.1} parent=1 // pred_region
      %107 = dma.done [#allocation9], 512
    $region45: #{tpu_custom_call.1} parent=1 // pred_fallthru
      _
    // Predicated region
    $region46: #{tpu_custom_call.1} parent=1 // pred_check
      _
    $region47: #{tpu_custom_call.1} parent=1 // pred_check_branch
      %109 = sbr.rel (0) target = $region49
    $region48: #{tpu_custom_call.1} parent=1 // pred_region
      %111 = dma.done [#allocation12], 128
    $region49: #{tpu_custom_call.1} parent=1 // pred_fallthru
      _
    %v112 = vld [vmem:[#allocation2] sm:$0xff]
    %v113 = vld [vmem:[#allocation5] sm:$0xff]
    %v114 = vld [vmem:[#allocation7] sm:$0xff]
    %v115 = vld [vmem:[#allocation7 + $0x8] sm:$0xff]
    %v116 = vld [vmem:[#allocation7 + $0x10] sm:$0xff]
    %v117 = vld [vmem:[#allocation7 + $0x18] sm:$0xff]
    %v118 = vld [vmem:[#allocation8] sm:$0xff]
    %v119 = vld [vmem:[#allocation8 + $0x8] sm:$0xff]
    %v120 = vld [vmem:[#allocation8 + $0x10] sm:$0xff]
    %v121 = vld [vmem:[#allocation8 + $0x18] sm:$0xff]
    %v122 = vld [vmem:[#allocation10] sm:$0xff]
    %v123 = vld [vmem:[#allocation10 + $0x8] sm:$0xff]
    %v124 = vld [vmem:[#allocation10 + $0x10] sm:$0xff]
    %v125 = vld [vmem:[#allocation10 + $0x18] sm:$0xff]
    %v126 = vld [vmem:[#allocation11] sm:$0xff]
    %v127 = vmul.f32 %v112, %v112
    %vm128 = vcmask 261120
    %v129 = vsel %vm128, %v127, 0.0
    %130 = vadd.xlane.f32.xlu0 %v129
    %v131 = vpop.xlane.xlu0 %130
    %v132 = vrsqrt.pop %v131
    %v133 = vmul.f32 %v132, %v131
    %v134 = vmul.f32 %v133, %v132
    %v135 = vmul.f32 0.5, %v134
    %v136 = vsub.f32 1.5, %v135
    %v137 = vmul.f32 %v132, %v136
    %v138 = vmul.f32 %v131, %v137
    %vm139 = vcmp.eq.f32.partialorder %v131, inf
    %v140 = vsel %vm139, %v131, %v138
    %vm141 = vcmp.eq.f32.partialorder %v131, 0.0
    %v142 = vand.u32 %v131, 2147483648
    %v143 = vsel %vm141, %v142, %v140
    %vm144 = vcmp.gt.f32.partialorder %v143, 0.99999
    %v145 = vmax.f32 %v143, 1e-15
    %v146 = vrcp.pop %v145
    %v147 = vmul.f32 %v146, 0.99999
    %v148 = vsel %vm144, %v147, 1.0
    %v149 = vmul.f32 %v112, %v148
    %v150 = vmul.f32 %v149, %v149
    %v151 = vsel %vm128, %v150, 0.0
    %152 = vadd.xlane.f32.xlu0 %v151
    %v153 = vpop.xlane.xlu0 %152
    %v154 = vrsqrt.pop %v153
    %v155 = vmul.f32 %v154, %v153
    %v156 = vmul.f32 %v155, %v154
    %v157 = vmul.f32 0.5, %v156
    %v158 = vsub.f32 1.5, %v157
    %v159 = vmul.f32 %v154, %v158
    %v160 = vmul.f32 %v153, %v159
    %vm161 = vcmp.eq.f32.partialorder %v153, inf
    %v162 = vsel %vm161, %v153, %v160
    %vm163 = vcmp.eq.f32.partialorder %v153, 0.0
    %v164 = vand.u32 %v153, 2147483648
    %v165 = vsel %vm163, %v164, %v162
    %v166 = vmax.f32 %v165, 1e-15
    %v167 = vmax.f32 %v166, 0.0
    %v168 = vmin.f32 %v167, 0.9999999
    %v169 = vadd.f32 %v168, 1.0
    %v170 = vsub.f32 1.0, %v168
    %v171 = vrcp.pop %v170
    %v172 = vmul.f32 %v170, %v171
    %v173 = vsub.f32 1.0, %v172
    %v174 = vmul.f32 %v171, %v173
    %v175 = vadd.f32 %v171, %v174
    %vm176 = vweird.f32 %v170
    %vm177 = vweird.f32 %v171
    %vm178 = vmor %vm176, %vm177
    %v179 = vsel %vm178, %v171, %v175
    %v180 = vand.u32 2147483647, %v170
    %vm181 = vcmp.eq.f32.partialorder %v180, 8.507059e+37
    %v182 = vand.u32 %v170, 2147483648
    %v183 = vor.u32 1.1754944e-38, %v182
    %v184 = vsel %vm181, %v183, %v179
    %v185 = vmul.f32 %v169, %v184
    %v186 = vlog2.pop %v185
    %v187 = vmul.f32 %v186, 0.6931472
    %v188 = vmul.f32 %v187, 0.5
    %v189 = vrcp.pop %v166
    %v190 = vmul.f32 %v188, %v189
    %v191 = vmul.f32 %v113, %v113
    %v192 = vsel %vm128, %v191, 0.0
    %193 = vadd.xlane.f32.xlu0 %v192
    %v194 = vpop.xlane.xlu0 %193
    %v195 = vrsqrt.pop %v194
    %v196 = vmul.f32 %v195, %v194
    %v197 = vmul.f32 %v196, %v195
    %v198 = vmul.f32 0.5, %v197
    %v199 = vsub.f32 1.5, %v198
    %v200 = vmul.f32 %v195, %v199
    %v201 = vmul.f32 %v194, %v200
    %vm202 = vcmp.eq.f32.partialorder %v194, inf
    %v203 = vsel %vm202, %v194, %v201
    %vm204 = vcmp.eq.f32.partialorder %v194, 0.0
    %v205 = vand.u32 %v194, 2147483648
    %v206 = vsel %vm204, %v205, %v203
    %vm207 = vcmp.gt.f32.partialorder %v206, 0.99999
    %v208 = vmax.f32 %v206, 1e-15
    %v209 = vrcp.pop %v208
    %v210 = vmul.f32 %v209, 0.99999
    %v211 = vsel %vm207, %v210, 1.0
    %v212 = vmul.f32 %v113, %v211
    %v213 = vmul.f32 %v212, %v212
    %v214 = vsel %vm128, %v213, 0.0
    %215 = vadd.xlane.f32.xlu0 %v214
    %v216 = vpop.xlane.xlu0 %215
    %v217 = vrsqrt.pop %v216
    %v218 = vmul.f32 %v217, %v216
    %v219 = vmul.f32 %v218, %v217
    %v220 = vmul.f32 0.5, %v219
    %v221 = vsub.f32 1.5, %v220
    %v222 = vmul.f32 %v217, %v221
    %v223 = vmul.f32 %v216, %v222
    %vm224 = vcmp.eq.f32.partialorder %v216, inf
    %v225 = vsel %vm224, %v216, %v223
    %vm226 = vcmp.eq.f32.partialorder %v216, 0.0
    %v227 = vand.u32 %v216, 2147483648
    %v228 = vsel %vm226, %v227, %v225
    %v229 = vmax.f32 %v228, 1e-15
    %v230 = vmax.f32 %v229, 0.0
    %v231 = vmin.f32 %v230, 0.9999999
    %v232 = vadd.f32 %v231, 1.0
    %v233 = vsub.f32 1.0, %v231
    %v234 = vrcp.pop %v233
    %v235 = vmul.f32 %v233, %v234
    %v236 = vsub.f32 1.0, %v235
    %v237 = vmul.f32 %v234, %v236
    %v238 = vadd.f32 %v234, %v237
    %vm239 = vweird.f32 %v233
    %vm240 = vweird.f32 %v234
    %vm241 = vmor %vm239, %vm240
    %v242 = vsel %vm241, %v234, %v238
    %v243 = vand.u32 2147483647, %v233
    %vm244 = vcmp.eq.f32.partialorder %v243, 8.507059e+37
    %v245 = vand.u32 %v233, 2147483648
    %v246 = vor.u32 1.1754944e-38, %v245
    %v247 = vsel %vm244, %v246, %v242
    %v248 = vmul.f32 %v232, %v247
    %v249 = vlog2.pop %v248
    %v250 = vmul.f32 %v249, 0.6931472
    %v251 = vmul.f32 %v250, 0.5
    %v252 = vrcp.pop %v229
    %v253 = vmul.f32 %v251, %v252
    %v255 = vsel %vm128, %v212, 0
    %257 = vmatpush.msra.mxu0 0.0
    %258 = vmatpush.msra.mxu0 0.0
    %259 = vmatpush.msra.mxu0 0.0
    %260 = vmatpush.msra.mxu0 0.0
    %261 = vmatpush.msra.mxu0 0.0
    %262 = vmatpush.msra.mxu0 0.0
    %263 = vmatpush.msra.mxu0 0.0
    %264 = vmatpush.msra.mxu0 0.0
    %265 = vmatpush.msra.mxu0 0.0
    %266 = vmatpush.msra.mxu0 0.0
    %267 = vmatpush.msra.mxu0 0.0
    %268 = vmatpush.msra.mxu0 0.0
    %269 = vmatpush.msra.mxu0 %v117
    %270 = vmatpush.msra.mxu0 %v116
    %271 = vmatpush.msra.mxu0 %v115
    %272 = vmatpush.msra.mxu0 %v114
    %273 = vmatmul.f32.gmra.mxu0 %v255
    %v274 = vpop.f32.mrf.mxu0
    %v275 = vadd.f32 0.0, %v274
    %276 = vdwg.mxu0
    %v278 = vsel %vm128, %v149, 0
    %280 = vmatpush.msra.mxu0 0.0
    %281 = vmatpush.msra.mxu0 0.0
    %282 = vmatpush.msra.mxu0 0.0
    %283 = vmatpush.msra.mxu0 0.0
    %284 = vmatpush.msra.mxu0 0.0
    %285 = vmatpush.msra.mxu0 0.0
    %286 = vmatpush.msra.mxu0 0.0
    %287 = vmatpush.msra.mxu0 0.0
    %288 = vmatpush.msra.mxu0 0.0
    %289 = vmatpush.msra.mxu0 0.0
    %290 = vmatpush.msra.mxu0 0.0
    %291 = vmatpush.msra.mxu0 0.0
    %292 = vmatpush.msra.mxu0 %v121
    %293 = vmatpush.msra.mxu0 %v120
    %294 = vmatpush.msra.mxu0 %v119
    %295 = vmatpush.msra.mxu0 %v118
    %296 = vmatmul.f32.gmra.mxu0 %v278
    %v297 = vpop.f32.mrf.mxu0
    %v298 = vadd.f32 0.0, %v297
    %299 = vdwg.mxu0
    %v300 = vmul.f32 %v275, %v275
    %v301 = vsel %vm128, %v300, 0.0
    %302 = vadd.xlane.f32.xlu0 %v301
    %v303 = vpop.xlane.xlu0 %302
    %v304 = vrsqrt.pop %v303
    %v305 = vmul.f32 %v304, %v303
    %v306 = vmul.f32 %v305, %v304
    %v307 = vmul.f32 0.5, %v306
    %v308 = vsub.f32 1.5, %v307
    %v309 = vmul.f32 %v304, %v308
    %v310 = vmul.f32 %v303, %v309
    %vm311 = vcmp.eq.f32.partialorder %v303, inf
    %v312 = vsel %vm311, %v303, %v310
    %vm313 = vcmp.eq.f32.partialorder %v303, 0.0
    %v314 = vand.u32 %v303, 2147483648
    %v315 = vsel %vm313, %v314, %v312
    %v316 = vmax.f32 %v315, 1e-15
    %v317 = vmul.f32 %v316, %v253
    %v318 = vmax.f32 %v317, -15.0
    %v319 = vmin.f32 %v318, 15.0
    %v320 = vtanh.pop %v319
    %v321 = vmul.f32 %v320, %v275
    %v322 = vrcp.pop %v316
    %v323 = vmul.f32 %v321, %v322
    %v324 = vmul.f32 %v323, %v323
    %v325 = vsel %vm128, %v324, 0.0
    %326 = vadd.xlane.f32.xlu0 %v325
    %v327 = vpop.xlane.xlu0 %326
    %v328 = vrsqrt.pop %v327
    %v329 = vmul.f32 %v328, %v327
    %v330 = vmul.f32 %v329, %v328
    %v331 = vmul.f32 0.5, %v330
    %v332 = vsub.f32 1.5, %v331
    %v333 = vmul.f32 %v328, %v332
    %v334 = vmul.f32 %v327, %v333
    %vm335 = vcmp.eq.f32.partialorder %v327, inf
    %v336 = vsel %vm335, %v327, %v334
    %vm337 = vcmp.eq.f32.partialorder %v327, 0.0
    %v338 = vand.u32 %v327, 2147483648
    %v339 = vsel %vm337, %v338, %v336
    %vm340 = vcmp.gt.f32.partialorder %v339, 0.99999
    %v341 = vmax.f32 %v339, 1e-15
    %v342 = vrcp.pop %v341
    %v343 = vmul.f32 %v342, 0.99999
    %v344 = vsel %vm340, %v343, 1.0
    %v345 = vmul.f32 %v323, %v344
    %347 = vrot.lane.b32.xlu0 %v300, 96
    %v348 = vpop.permute.xlu0 %347
    %v350 = vsel %vm128, %v348, 0.0
    %351 = vadd.xlane.f32.xlu0 %v350
    %v352 = vpop.xlane.xlu0 %351
    %v353 = vrsqrt.pop %v352
    %v354 = vmul.f32 %v353, %v352
    %v355 = vmul.f32 %v354, %v353
    %v356 = vmul.f32 0.5, %v355
    %v357 = vsub.f32 1.5, %v356
    %v358 = vmul.f32 %v353, %v357
    %v359 = vmul.f32 %v352, %v358
    %vm360 = vcmp.eq.f32.partialorder %v352, inf
    %v361 = vsel %vm360, %v352, %v359
    %vm362 = vcmp.eq.f32.partialorder %v352, 0.0
    %v363 = vand.u32 %v352, 2147483648
    %v364 = vsel %vm362, %v363, %v361
    %v365 = vmax.f32 %v364, 1e-15
    %v366 = vmul.f32 %v365, %v253
    %v367 = vmax.f32 %v366, -15.0
    %v368 = vmin.f32 %v367, 15.0
    %v369 = vtanh.pop %v368
    %v370 = vmul.f32 %v369, %v275
    %v371 = vrcp.pop %v365
    %v372 = vmul.f32 %v370, %v371
    %v373 = vmul.f32 %v372, %v372
    %375 = vrot.lane.b32.xlu0 %v373, 96
    %v376 = vpop.permute.xlu0 %375
    %v378 = vsel %vm128, %v376, 0.0
    %379 = vadd.xlane.f32.xlu0 %v378
    %v380 = vpop.xlane.xlu0 %379
    %v381 = vrsqrt.pop %v380
    %v382 = vmul.f32 %v381, %v380
    %v383 = vmul.f32 %v382, %v381
    %v384 = vmul.f32 0.5, %v383
    %v385 = vsub.f32 1.5, %v384
    %v386 = vmul.f32 %v381, %v385
    %v387 = vmul.f32 %v380, %v386
    %vm388 = vcmp.eq.f32.partialorder %v380, inf
    %v389 = vsel %vm388, %v380, %v387
    %vm390 = vcmp.eq.f32.partialorder %v380, 0.0
    %v391 = vand.u32 %v380, 2147483648
    %v392 = vsel %vm390, %v391, %v389
    %vm393 = vcmp.gt.f32.partialorder %v392, 0.99999
    %v394 = vmax.f32 %v392, 1e-15
    %v395 = vrcp.pop %v394
    %v396 = vmul.f32 %v395, 0.99999
    %v397 = vsel %vm393, %v396, 1.0
    %v398 = vmul.f32 %v372, %v397
    %v399 = vmul.f32 %v298, %v298
    %v400 = vsel %vm128, %v399, 0.0
    %401 = vadd.xlane.f32.xlu0 %v400
    %v402 = vpop.xlane.xlu0 %401
    %v403 = vrsqrt.pop %v402
    %v404 = vmul.f32 %v403, %v402
    %v405 = vmul.f32 %v404, %v403
    %v406 = vmul.f32 0.5, %v405
    %v407 = vsub.f32 1.5, %v406
    %v408 = vmul.f32 %v403, %v407
    %v409 = vmul.f32 %v402, %v408
    %vm410 = vcmp.eq.f32.partialorder %v402, inf
    %v411 = vsel %vm410, %v402, %v409
    %vm412 = vcmp.eq.f32.partialorder %v402, 0.0
    %v413 = vand.u32 %v402, 2147483648
    %v414 = vsel %vm412, %v413, %v411
    %v415 = vmax.f32 %v414, 1e-15
    %v416 = vmul.f32 %v415, %v190
    %v417 = vmax.f32 %v416, -15.0
    %v418 = vmin.f32 %v417, 15.0
    %v419 = vtanh.pop %v418
    %v420 = vmul.f32 %v419, %v298
    %v421 = vrcp.pop %v415
    %v422 = vmul.f32 %v420, %v421
    %v423 = vmul.f32 %v422, %v422
    %v424 = vsel %vm128, %v423, 0.0
    %425 = vadd.xlane.f32.xlu0 %v424
    %v426 = vpop.xlane.xlu0 %425
    %v427 = vrsqrt.pop %v426
    %v428 = vmul.f32 %v427, %v426
    %v429 = vmul.f32 %v428, %v427
    %v430 = vmul.f32 0.5, %v429
    %v431 = vsub.f32 1.5, %v430
    %v432 = vmul.f32 %v427, %v431
    %v433 = vmul.f32 %v426, %v432
    %vm434 = vcmp.eq.f32.partialorder %v426, inf
    %v435 = vsel %vm434, %v426, %v433
    %vm436 = vcmp.eq.f32.partialorder %v426, 0.0
    %v437 = vand.u32 %v426, 2147483648
    %v438 = vsel %vm436, %v437, %v435
    %vm439 = vcmp.gt.f32.partialorder %v438, 0.99999
    %v440 = vmax.f32 %v438, 1e-15
    %v441 = vrcp.pop %v440
    %v442 = vmul.f32 %v441, 0.99999
    %v443 = vsel %vm439, %v442, 1.0
    %v444 = vmul.f32 %v422, %v443
    %446 = vrot.lane.b32.xlu0 %v399, 96
    %v447 = vpop.permute.xlu0 %446
    %v449 = vsel %vm128, %v447, 0.0
    %450 = vadd.xlane.f32.xlu0 %v449
    %v451 = vpop.xlane.xlu0 %450
    %v452 = vrsqrt.pop %v451
    %v453 = vmul.f32 %v452, %v451
    %v454 = vmul.f32 %v453, %v452
    %v455 = vmul.f32 0.5, %v454
    %v456 = vsub.f32 1.5, %v455
    %v457 = vmul.f32 %v452, %v456
    %v458 = vmul.f32 %v451, %v457
    %vm459 = vcmp.eq.f32.partialorder %v451, inf
    %v460 = vsel %vm459, %v451, %v458
    %vm461 = vcmp.eq.f32.partialorder %v451, 0.0
    %v462 = vand.u32 %v451, 2147483648
    %v463 = vsel %vm461, %v462, %v460
    %v464 = vmax.f32 %v463, 1e-15
    %v465 = vmul.f32 %v464, %v190
    %v466 = vmax.f32 %v465, -15.0
    %v467 = vmin.f32 %v466, 15.0
    %v468 = vtanh.pop %v467
    %v469 = vmul.f32 %v468, %v298
    %v470 = vrcp.pop %v464
    %v471 = vmul.f32 %v469, %v470
    %v472 = vmul.f32 %v471, %v471
    %474 = vrot.lane.b32.xlu0 %v472, 96
    %v475 = vpop.permute.xlu0 %474
    %v477 = vsel %vm128, %v475, 0.0
    %478 = vadd.xlane.f32.xlu0 %v477
    %v479 = vpop.xlane.xlu0 %478
    %v480 = vrsqrt.pop %v479
    %v481 = vmul.f32 %v480, %v479
    %v482 = vmul.f32 %v481, %v480
    %v483 = vmul.f32 0.5, %v482
    %v484 = vsub.f32 1.5, %v483
    %v485 = vmul.f32 %v480, %v484
    %v486 = vmul.f32 %v479, %v485
    %vm487 = vcmp.eq.f32.partialorder %v479, inf
    %v488 = vsel %vm487, %v479, %v486
    %vm489 = vcmp.eq.f32.partialorder %v479, 0.0
    %v490 = vand.u32 %v479, 2147483648
    %v491 = vsel %vm489, %v490, %v488
    %vm492 = vcmp.gt.f32.partialorder %v491, 0.99999
    %v493 = vmax.f32 %v491, 1e-15
    %v494 = vrcp.pop %v493
    %v495 = vmul.f32 %v494, 0.99999
    %v496 = vsel %vm492, %v495, 1.0
    %v497 = vmul.f32 %v471, %v496
    %v498 = vmul.f32 %v345, %v444
    %v499 = vsel %vm128, %v498, 0.0
    %500 = vadd.xlane.f32.xlu0 %v499
    %v501 = vpop.xlane.xlu0 %500
    %v502 = vmul.f32 %v345, %v345
    %v503 = vsel %vm128, %v502, 0.0
    %504 = vadd.xlane.f32.xlu0 %v503
    %v505 = vpop.xlane.xlu0 %504
    %v506 = vmul.f32 %v444, %v444
    %v507 = vsel %vm128, %v506, 0.0
    %508 = vadd.xlane.f32.xlu0 %v507
    %v509 = vpop.xlane.xlu0 %508
    %v510 = vmul.f32 %v501, 2.0
    %v511 = vadd.f32 %v510, 1.0
    %v512 = vadd.f32 %v511, %v509
    %v513 = vmul.f32 %v512, %v345
    %v514 = vsub.f32 1.0, %v505
    %v515 = vmul.f32 %v514, %v444
    %v516 = vadd.f32 %v513, %v515
    %v517 = vmul.f32 %v505, %v509
    %v518 = vadd.f32 %v511, %v517
    %v519 = vmax.f32 %v518, 1e-15
    %v520 = vrcp.pop %v519
    %v521 = vmul.f32 %v516, %v520
    %v522 = vmul.f32 %v521, %v521
    %v523 = vsel %vm128, %v522, 0.0
    %524 = vadd.xlane.f32.xlu0 %v523
    %v525 = vpop.xlane.xlu0 %524
    %v526 = vrsqrt.pop %v525
    %v527 = vmul.f32 %v526, %v525
    %v528 = vmul.f32 %v527, %v526
    %v529 = vmul.f32 0.5, %v528
    %v530 = vsub.f32 1.5, %v529
    %v531 = vmul.f32 %v526, %v530
    %v532 = vmul.f32 %v525, %v531
    %vm533 = vcmp.eq.f32.partialorder %v525, inf
    %v534 = vsel %vm533, %v525, %v532
    %vm535 = vcmp.eq.f32.partialorder %v525, 0.0
    %v536 = vand.u32 %v525, 2147483648
    %v537 = vsel %vm535, %v536, %v534
    %vm538 = vcmp.gt.f32.partialorder %v537, 0.99999
    %v539 = vmax.f32 %v537, 1e-15
    %v540 = vrcp.pop %v539
    %v541 = vmul.f32 %v540, 0.99999
    %v542 = vsel %vm538, %v541, 1.0
    %v543 = vmul.f32 %v521, %v542
    %v544 = vperm.slane %v126, 0
    %v545 = vmul.f32 %v543, %v544
    %v546 = vsel %vm128, %v545, 0.0
    %547 = vadd.xlane.f32.xlu0 %v546
    %v548 = vpop.xlane.xlu0 %547
    %v549 = vmul.f32 %v543, %v543
    %v550 = vsel %vm128, %v549, 0.0
    %551 = vadd.xlane.f32.xlu0 %v550
    %v552 = vpop.xlane.xlu0 %551
    %v553 = vmul.f32 %v126, %v126
    %vm554 = vcmask 253952
    %v555 = vsel %vm554, %v553, 0.0
    %556 = vadd.xlane.f32.xlu0 %v555
    %v557 = vpop.xlane.xlu0 %556
    %v558 = vmul.f32 %v548, 2.0
    %v559 = vadd.f32 %v558, 1.0
    %v560 = vperm.slane %v557, 0
    %v561 = vadd.f32 %v559, %v560
    %v562 = vmul.f32 %v561, %v543
    %v563 = vsub.f32 1.0, %v552
    %v564 = vmul.f32 %v563, %v544
    %v565 = vadd.f32 %v562, %v564
    %v566 = vmul.f32 %v552, %v560
    %v567 = vadd.f32 %v559, %v566
    %v568 = vmax.f32 %v567, 1e-15
    %v569 = vrcp.pop %v568
    %v570 = vmul.f32 %v565, %v569
    %v571 = vmul.f32 %v570, %v570
    %v572 = vsel %vm128, %v571, 0.0
    %573 = vadd.xlane.f32.xlu0 %v572
    %v574 = vpop.xlane.xlu0 %573
    %v575 = vrsqrt.pop %v574
    %v576 = vmul.f32 %v575, %v574
    %v577 = vmul.f32 %v576, %v575
    %v578 = vmul.f32 0.5, %v577
    %v579 = vsub.f32 1.5, %v578
    %v580 = vmul.f32 %v575, %v579
    %v581 = vmul.f32 %v574, %v580
    %vm582 = vcmp.eq.f32.partialorder %v574, inf
    %v583 = vsel %vm582, %v574, %v581
    %vm584 = vcmp.eq.f32.partialorder %v574, 0.0
    %v585 = vand.u32 %v574, 2147483648
    %v586 = vsel %vm584, %v585, %v583
    %vm587 = vcmp.gt.f32.partialorder %v586, 0.99999
    %v588 = vmax.f32 %v586, 1e-15
    %v589 = vrcp.pop %v588
    %v590 = vmul.f32 %v589, 0.99999
    %v591 = vsel %vm587, %v590, 1.0
    %v592 = vmul.f32 %v570, %v591
    %v593 = vmul.f32 %v592, %v592
    %v594 = vsel %vm128, %v593, 0.0
    %595 = vadd.xlane.f32.xlu0 %v594
    %v596 = vpop.xlane.xlu0 %595
    %v597 = vrsqrt.pop %v596
    %v598 = vmul.f32 %v597, %v596
    %v599 = vmul.f32 %v598, %v597
    %v600 = vmul.f32 0.5, %v599
    %v601 = vsub.f32 1.5, %v600
    %v602 = vmul.f32 %v597, %v601
    %v603 = vmul.f32 %v596, %v602
    %vm604 = vcmp.eq.f32.partialorder %v596, inf
    %v605 = vsel %vm604, %v596, %v603
    %vm606 = vcmp.eq.f32.partialorder %v596, 0.0
    %v607 = vand.u32 %v596, 2147483648
    %v608 = vsel %vm606, %v607, %v605
    %vm609 = vcmp.gt.f32.partialorder %v608, 0.99999
    %v610 = vmax.f32 %v608, 1e-15
    %v611 = vrcp.pop %v610
    %v612 = vmul.f32 %v611, 0.99999
    %v613 = vsel %vm609, %v612, 1.0
    %v614 = vmul.f32 %v592, %v613
    %v615 = vmul.f32 %v614, %v614
    %v616 = vsel %vm128, %v615, 0.0
    %617 = vadd.xlane.f32.xlu0 %v616
    %v618 = vpop.xlane.xlu0 %617
    %v619 = vrsqrt.pop %v618
    %v620 = vmul.f32 %v619, %v618
    %v621 = vmul.f32 %v620, %v619
    %v622 = vmul.f32 0.5, %v621
    %v623 = vsub.f32 1.5, %v622
    %v624 = vmul.f32 %v619, %v623
    %v625 = vmul.f32 %v618, %v624
    %vm626 = vcmp.eq.f32.partialorder %v618, inf
    %v627 = vsel %vm626, %v618, %v625
    %vm628 = vcmp.eq.f32.partialorder %v618, 0.0
    %v629 = vand.u32 %v618, 2147483648
    %v630 = vsel %vm628, %v629, %v627
    %v631 = vmax.f32 %v630, 1e-15
    %v632 = vmax.f32 %v631, 0.0
    %v633 = vmin.f32 %v632, 0.9999999
    %v634 = vadd.f32 %v633, 1.0
    %v635 = vsub.f32 1.0, %v633
    %v636 = vrcp.pop %v635
    %v637 = vmul.f32 %v635, %v636
    %v638 = vsub.f32 1.0, %v637
    %v639 = vmul.f32 %v636, %v638
    %v640 = vadd.f32 %v636, %v639
    %vm641 = vweird.f32 %v635
    %vm642 = vweird.f32 %v636
    %vm643 = vmor %vm641, %vm642
    %v644 = vsel %vm643, %v636, %v640
    %v645 = vand.u32 2147483647, %v635
    %vm646 = vcmp.eq.f32.partialorder %v645, 8.507059e+37
    %v647 = vand.u32 %v635, 2147483648
    %v648 = vor.u32 1.1754944e-38, %v647
    %v649 = vsel %vm646, %v648, %v644
    %v650 = vmul.f32 %v634, %v649
    %v651 = vlog2.pop %v650
    %v652 = vmul.f32 %v651, 0.6931472
    %v653 = vmul.f32 %v652, 0.5
    %v654 = vrcp.pop %v631
    %v655 = vmul.f32 %v653, %v654
    %v656 = vmul.f32 %v655, %v614
    %v657 = vsel %vm128, %v656, 0.0
    %658 = vadd.xlane.f32.xlu0 %v657
    %v659 = vpop.xlane.xlu0 %658
    %v660 = vrcp.pop 32.0
    %v661 = vmul.f32 32.0, %v660
    %v662 = vsub.f32 1.0, %v661
    %v663 = vmul.f32 %v660, %v662
    %v664 = vadd.f32 %v660, %v663
    %vm665 = vweird.f32 %v660
    %v666 = vsel %vm665, %v660, %v664
    %v667 = vmul.f32 %v659, %v666
    %v668 = vsub.f32 %v656, %v667
    %v669 = vmul.f32 %v668, %v668
    %v670 = vsel %vm128, %v669, 0.0
    %671 = vadd.xlane.f32.xlu0 %v670
    %v672 = vpop.xlane.xlu0 %671
    %v673 = vmul.f32 %v672, %v666
    %v674 = vadd.f32 %v673, 1e-05
    %v675 = vrsqrt.pop %v674
    %v676 = vmul.f32 %v675, %v674
    %v677 = vmul.f32 %v676, %v675
    %v678 = vmul.f32 0.5, %v677
    %v679 = vsub.f32 1.5, %v678
    %v680 = vmul.f32 %v675, %v679
    %vm681 = vweird.f32 %v674
    %vm682 = vweird.f32 %v675
    %vm683 = vmor %vm681, %vm682
    %v684 = vsel %vm683, %v675, %v680
    %v685 = vmul.f32 %v668, %v684
    %v686 = vperm.slane %v126, 3
    %v687 = vmul.f32 %v685, %v686
    %v688 = vperm.slane %v126, 4
    %v689 = vadd.f32 %v687, %v688
    %v690 = vxor.u32 %v689, 2147483648
    %v691 = vmul.f32 %v690, 1.442695
    %v692 = vpow.pop %v691
    %v693 = vadd.f32 %v692, 1.0
    %v694 = vrcp.pop %v693
    %v695 = vmul.f32 %v693, %v694
    %v696 = vsub.f32 1.0, %v695
    %v697 = vmul.f32 %v694, %v696
    %v698 = vadd.f32 %v694, %v697
    %vm699 = vweird.f32 %v693
    %vm700 = vweird.f32 %v694
    %vm701 = vmor %vm699, %vm700
    %v702 = vsel %vm701, %v694, %v698
    %v703 = vand.u32 2147483647, %v693
    %vm704 = vcmp.eq.f32.partialorder %v703, 8.507059e+37
    %v705 = vand.u32 %v693, 2147483648
    %v706 = vor.u32 1.1754944e-38, %v705
    %v707 = vsel %vm704, %v706, %v702
    %v708 = vmul.f32 1.0, %v707
    %v709 = vmul.f32 %v398, %v497
    %711 = vrot.lane.b32.xlu0 %v709, 96
    %v712 = vpop.permute.xlu0 %711
    %v714 = vsel %vm128, %v712, 0.0
    %715 = vadd.xlane.f32.xlu0 %v714
    %v716 = vpop.xlane.xlu0 %715
    %v717 = vmul.f32 %v398, %v398
    %719 = vrot.lane.b32.xlu0 %v717, 96
    %v720 = vpop.permute.xlu0 %719
    %v722 = vsel %vm128, %v720, 0.0
    %723 = vadd.xlane.f32.xlu0 %v722
    %v724 = vpop.xlane.xlu0 %723
    %v725 = vmul.f32 %v497, %v497
    %727 = vrot.lane.b32.xlu0 %v725, 96
    %v728 = vpop.permute.xlu0 %727
    %v730 = vsel %vm128, %v728, 0.0
    %731 = vadd.xlane.f32.xlu0 %v730
    %v732 = vpop.xlane.xlu0 %731
    %v733 = vmul.f32 %v716, 2.0
    %v734 = vadd.f32 %v733, 1.0
    %v735 = vadd.f32 %v734, %v732
    %v736 = vmul.f32 %v735, %v398
    %v737 = vsub.f32 1.0, %v724
    %v738 = vmul.f32 %v737, %v497
    %v739 = vadd.f32 %v736, %v738
    %v740 = vmul.f32 %v724, %v732
    %v741 = vadd.f32 %v734, %v740
    %v742 = vmax.f32 %v741, 1e-15
    %v743 = vrcp.pop %v742
    %v744 = vmul.f32 %v739, %v743
    %v745 = vmul.f32 %v744, %v744
    %747 = vrot.lane.b32.xlu0 %v745, 96
    %v748 = vpop.permute.xlu0 %747
    %v750 = vsel %vm128, %v748, 0.0
    %751 = vadd.xlane.f32.xlu0 %v750
    %v752 = vpop.xlane.xlu0 %751
    %v753 = vrsqrt.pop %v752
    %v754 = vmul.f32 %v753, %v752
    %v755 = vmul.f32 %v754, %v753
    %v756 = vmul.f32 0.5, %v755
    %v757 = vsub.f32 1.5, %v756
    %v758 = vmul.f32 %v753, %v757
    %v759 = vmul.f32 %v752, %v758
    %vm760 = vcmp.eq.f32.partialorder %v752, inf
    %v761 = vsel %vm760, %v752, %v759
    %vm762 = vcmp.eq.f32.partialorder %v752, 0.0
    %v763 = vand.u32 %v752, 2147483648
    %v764 = vsel %vm762, %v763, %v761
    %vm765 = vcmp.gt.f32.partialorder %v764, 0.99999
    %v766 = vmax.f32 %v764, 1e-15
    %v767 = vrcp.pop %v766
    %v768 = vmul.f32 %v767, 0.99999
    %v769 = vsel %vm765, %v768, 1.0
    %v770 = vmul.f32 %v744, %v769
    %v771 = vperm.slane %v126, 1
    %773 = vrot.lane.b32.xlu0 %v771, 32
    %v774 = vpop.permute.xlu0 %773
    %v776 = vmul.f32 %v770, %v774
    %778 = vrot.lane.b32.xlu0 %v776, 96
    %v779 = vpop.permute.xlu0 %778
    %v781 = vsel %vm128, %v779, 0.0
    %782 = vadd.xlane.f32.xlu0 %v781
    %v783 = vpop.xlane.xlu0 %782
    %v784 = vmul.f32 %v770, %v770
    %786 = vrot.lane.b32.xlu0 %v784, 96
    %v787 = vpop.permute.xlu0 %786
    %v789 = vsel %vm128, %v787, 0.0
    %790 = vadd.xlane.f32.xlu0 %v789
    %v791 = vpop.xlane.xlu0 %790
    %vm792 = vcmask 254977
    %v793 = vsel %vm792, %v553, 0.0
    %794 = vadd.xlane.f32.xlu0 %v793
    %v795 = vpop.xlane.xlu0 %794
    %v796 = vmul.f32 %v783, 2.0
    %v797 = vadd.f32 %v796, 1.0
    %v798 = vperm.slane %v795, 1
    %v799 = vadd.f32 %v797, %v798
    %v800 = vmul.f32 %v799, %v770
    %v801 = vsub.f32 1.0, %v791
    %v802 = vmul.f32 %v801, %v771
    %804 = vrot.lane.b32.xlu0 %v802, 32
    %v805 = vpop.permute.xlu0 %804
    %v807 = vadd.f32 %v800, %v805
    %v808 = vmul.f32 %v791, %v798
    %v809 = vadd.f32 %v797, %v808
    %v810 = vmax.f32 %v809, 1e-15
    %v811 = vrcp.pop %v810
    %v812 = vmul.f32 %v807, %v811
    %v813 = vmul.f32 %v812, %v812
    %815 = vrot.lane.b32.xlu0 %v813, 96
    %v816 = vpop.permute.xlu0 %815
    %v818 = vsel %vm128, %v816, 0.0
    %819 = vadd.xlane.f32.xlu0 %v818
    %v820 = vpop.xlane.xlu0 %819
    %v821 = vrsqrt.pop %v820
    %v822 = vmul.f32 %v821, %v820
    %v823 = vmul.f32 %v822, %v821
    %v824 = vmul.f32 0.5, %v823
    %v825 = vsub.f32 1.5, %v824
    %v826 = vmul.f32 %v821, %v825
    %v827 = vmul.f32 %v820, %v826
    %vm828 = vcmp.eq.f32.partialorder %v820, inf
    %v829 = vsel %vm828, %v820, %v827
    %vm830 = vcmp.eq.f32.partialorder %v820, 0.0
    %v831 = vand.u32 %v820, 2147483648
    %v832 = vsel %vm830, %v831, %v829
    %vm833 = vcmp.gt.f32.partialorder %v832, 0.99999
    %v834 = vmax.f32 %v832, 1e-15
    %v835 = vrcp.pop %v834
    %v836 = vmul.f32 %v835, 0.99999
    %v837 = vsel %vm833, %v836, 1.0
    %v838 = vmul.f32 %v812, %v837
    %v839 = vmul.f32 %v838, %v838
    %841 = vrot.lane.b32.xlu0 %v839, 96
    %v842 = vpop.permute.xlu0 %841
    %v844 = vsel %vm128, %v842, 0.0
    %845 = vadd.xlane.f32.xlu0 %v844
    %v846 = vpop.xlane.xlu0 %845
    %v847 = vrsqrt.pop %v846
    %v848 = vmul.f32 %v847, %v846
    %v849 = vmul.f32 %v848, %v847
    %v850 = vmul.f32 0.5, %v849
    %v851 = vsub.f32 1.5, %v850
    %v852 = vmul.f32 %v847, %v851
    %v853 = vmul.f32 %v846, %v852
    %vm854 = vcmp.eq.f32.partialorder %v846, inf
    %v855 = vsel %vm854, %v846, %v853
    %vm856 = vcmp.eq.f32.partialorder %v846, 0.0
    %v857 = vand.u32 %v846, 2147483648
    %v858 = vsel %vm856, %v857, %v855
    %vm859 = vcmp.gt.f32.partialorder %v858, 0.99999
    %v860 = vmax.f32 %v858, 1e-15
    %v861 = vrcp.pop %v860
    %v862 = vmul.f32 %v861, 0.99999
    %v863 = vsel %vm859, %v862, 1.0
    %v864 = vmul.f32 %v838, %v863
    %v865 = vmul.f32 %v864, %v864
    %867 = vrot.lane.b32.xlu0 %v865, 96
    %v868 = vpop.permute.xlu0 %867
    %v870 = vsel %vm128, %v868, 0.0
    %871 = vadd.xlane.f32.xlu0 %v870
    %v872 = vpop.xlane.xlu0 %871
    %v873 = vrsqrt.pop %v872
    %v874 = vmul.f32 %v873, %v872
    %v875 = vmul.f32 %v874, %v873
    %v876 = vmul.f32 0.5, %v875
    %v877 = vsub.f32 1.5, %v876
    %v878 = vmul.f32 %v873, %v877
    %v879 = vmul.f32 %v872, %v878
    %vm880 = vcmp.eq.f32.partialorder %v872, inf
    %v881 = vsel %vm880, %v872, %v879
    %vm882 = vcmp.eq.f32.partialorder %v872, 0.0
    %v883 = vand.u32 %v872, 2147483648
    %v884 = vsel %vm882, %v883, %v881
    %v885 = vmax.f32 %v884, 1e-15
    %v886 = vmax.f32 %v885, 0.0
    %v887 = vmin.f32 %v886, 0.9999999
    %v888 = vadd.f32 %v887, 1.0
    %v889 = vsub.f32 1.0, %v887
    %v890 = vrcp.pop %v889
    %v891 = vmul.f32 %v889, %v890
    %v892 = vsub.f32 1.0, %v891
    %v893 = vmul.f32 %v890, %v892
    %v894 = vadd.f32 %v890, %v893
    %vm895 = vweird.f32 %v889
    %vm896 = vweird.f32 %v890
    %vm897 = vmor %vm895, %vm896
    %v898 = vsel %vm897, %v890, %v894
    %v899 = vand.u32 2147483647, %v889
    %vm900 = vcmp.eq.f32.partialorder %v899, 8.507059e+37
    %v901 = vand.u32 %v889, 2147483648
    %v902 = vor.u32 1.1754944e-38, %v901
    %v903 = vsel %vm900, %v902, %v898
    %v904 = vmul.f32 %v888, %v903
    %v905 = vlog2.pop %v904
    %v906 = vmul.f32 %v905, 0.6931472
    %v907 = vmul.f32 %v906, 0.5
    %v908 = vrcp.pop %v885
    %v909 = vmul.f32 %v907, %v908
    %v910 = vmul.f32 %v909, %v864
    %912 = vrot.lane.b32.xlu0 %v910, 96
    %v913 = vpop.permute.xlu0 %912
    %v915 = vsel %vm128, %v913, 0.0
    %916 = vadd.xlane.f32.xlu0 %v915
    %v917 = vpop.xlane.xlu0 %916
    %v918 = vmul.f32 %v917, %v666
    %v919 = vsub.f32 %v910, %v918
    %v920 = vmul.f32 %v919, %v919
    %922 = vrot.lane.b32.xlu0 %v920, 96
    %v923 = vpop.permute.xlu0 %922
    %v925 = vsel %vm128, %v923, 0.0
    %926 = vadd.xlane.f32.xlu0 %v925
    %v927 = vpop.xlane.xlu0 %926
    %v928 = vmul.f32 %v927, %v666
    %v929 = vadd.f32 %v928, 1e-05
    %v930 = vrsqrt.pop %v929
    %v931 = vmul.f32 %v930, %v929
    %v932 = vmul.f32 %v931, %v930
    %v933 = vmul.f32 0.5, %v932
    %v934 = vsub.f32 1.5, %v933
    %v935 = vmul.f32 %v930, %v934
    %vm936 = vweird.f32 %v929
    %vm937 = vweird.f32 %v930
    %vm938 = vmor %vm936, %vm937
    %v939 = vsel %vm938, %v930, %v935
    %v940 = vmul.f32 %v919, %v939
    %v941 = vperm.slane %v126, 5
    %943 = vrot.lane.b32.xlu0 %v941, 32
    %v944 = vpop.permute.xlu0 %943
    %v946 = vmul.f32 %v940, %v944
    %v947 = vperm.slane %v126, 6
    %949 = vrot.lane.b32.xlu0 %v947, 32
    %v950 = vpop.permute.xlu0 %949
    %v952 = vadd.f32 %v946, %v950
    %v953 = vxor.u32 %v952, 2147483648
    %v954 = vmul.f32 %v953, 1.442695
    %v955 = vpow.pop %v954
    %v956 = vadd.f32 %v955, 1.0
    %v957 = vrcp.pop %v956
    %v958 = vmul.f32 %v956, %v957
    %v959 = vsub.f32 1.0, %v958
    %v960 = vmul.f32 %v957, %v959
    %v961 = vadd.f32 %v957, %v960
    %vm962 = vweird.f32 %v956
    %vm963 = vweird.f32 %v957
    %vm964 = vmor %vm962, %vm963
    %v965 = vsel %vm964, %v957, %v961
    %v966 = vand.u32 2147483647, %v956
    %vm967 = vcmp.eq.f32.partialorder %v966, 8.507059e+37
    %v968 = vand.u32 %v956, 2147483648
    %v969 = vor.u32 1.1754944e-38, %v968
    %v970 = vsel %vm967, %v969, %v965
    %v971 = vmul.f32 1.0, %v970
    %973 = vrot.lane.b32.xlu0 %v971, 96
    %v974 = vpop.permute.xlu0 %973
    %v976 = vmul.f32 %v212, %v974
    %v977 = vmul.f32 %v976, %v976
    %v978 = vsel %vm128, %v977, 0.0
    %979 = vadd.xlane.f32.xlu0 %v978
    %v980 = vpop.xlane.xlu0 %979
    %v981 = vrsqrt.pop %v980
    %v982 = vmul.f32 %v981, %v980
    %v983 = vmul.f32 %v982, %v981
    %v984 = vmul.f32 0.5, %v983
    %v985 = vsub.f32 1.5, %v984
    %v986 = vmul.f32 %v981, %v985
    %v987 = vmul.f32 %v980, %v986
    %vm988 = vcmp.eq.f32.partialorder %v980, inf
    %v989 = vsel %vm988, %v980, %v987
    %vm990 = vcmp.eq.f32.partialorder %v980, 0.0
    %v991 = vand.u32 %v980, 2147483648
    %v992 = vsel %vm990, %v991, %v989
    %v993 = vmax.f32 %v992, 1e-15
    %v994 = vmul.f32 %v993, %v253
    %v995 = vmax.f32 %v994, -15.0
    %v996 = vmin.f32 %v995, 15.0
    %v997 = vtanh.pop %v996
    %v998 = vmul.f32 %v997, %v976
    %v999 = vrcp.pop %v993
    %v1000 = vmul.f32 %v998, %v999
    %v1001 = vmul.f32 %v1000, %v1000
    %v1002 = vsel %vm128, %v1001, 0.0
    %1003 = vadd.xlane.f32.xlu0 %v1002
    %v1004 = vpop.xlane.xlu0 %1003
    %v1005 = vrsqrt.pop %v1004
    %v1006 = vmul.f32 %v1005, %v1004
    %v1007 = vmul.f32 %v1006, %v1005
    %v1008 = vmul.f32 0.5, %v1007
    %v1009 = vsub.f32 1.5, %v1008
    %v1010 = vmul.f32 %v1005, %v1009
    %v1011 = vmul.f32 %v1004, %v1010
    %vm1012 = vcmp.eq.f32.partialorder %v1004, inf
    %v1013 = vsel %vm1012, %v1004, %v1011
    %vm1014 = vcmp.eq.f32.partialorder %v1004, 0.0
    %v1015 = vand.u32 %v1004, 2147483648
    %v1016 = vsel %vm1014, %v1015, %v1013
    %vm1017 = vcmp.gt.f32.partialorder %v1016, 0.99999
    %v1018 = vmax.f32 %v1016, 1e-15
    %v1019 = vrcp.pop %v1018
    %v1020 = vmul.f32 %v1019, 0.99999
    %v1021 = vsel %vm1017, %v1020, 1.0
    %v1022 = vmul.f32 %v1000, %v1021
    %v1023 = vmul.f32 %v1022, %v1022
    %v1024 = vsel %vm128, %v1023, 0.0
    %1025 = vadd.xlane.f32.xlu0 %v1024
    %v1026 = vpop.xlane.xlu0 %1025
    %v1027 = vrsqrt.pop %v1026
    %v1028 = vmul.f32 %v1027, %v1026
    %v1029 = vmul.f32 %v1028, %v1027
    %v1030 = vmul.f32 0.5, %v1029
    %v1031 = vsub.f32 1.5, %v1030
    %v1032 = vmul.f32 %v1027, %v1031
    %v1033 = vmul.f32 %v1026, %v1032
    %vm1034 = vcmp.eq.f32.partialorder %v1026, inf
    %v1035 = vsel %vm1034, %v1026, %v1033
    %vm1036 = vcmp.eq.f32.partialorder %v1026, 0.0
    %v1037 = vand.u32 %v1026, 2147483648
    %v1038 = vsel %vm1036, %v1037, %v1035
    %vm1039 = vcmp.gt.f32.partialorder %v1038, 0.99999
    %v1040 = vmax.f32 %v1038, 1e-15
    %v1041 = vrcp.pop %v1040
    %v1042 = vmul.f32 %v1041, 0.99999
    %v1043 = vsel %vm1039, %v1042, 1.0
    %v1044 = vmul.f32 %v1022, %v1043
    %v1045 = vmul.f32 %v1044, %v1044
    %v1046 = vsel %vm128, %v1045, 0.0
    %1047 = vadd.xlane.f32.xlu0 %v1046
    %v1048 = vpop.xlane.xlu0 %1047
    %v1049 = vrsqrt.pop %v1048
    %v1050 = vmul.f32 %v1049, %v1048
    %v1051 = vmul.f32 %v1050, %v1049
    %v1052 = vmul.f32 0.5, %v1051
    %v1053 = vsub.f32 1.5, %v1052
    %v1054 = vmul.f32 %v1049, %v1053
    %v1055 = vmul.f32 %v1048, %v1054
    %vm1056 = vcmp.eq.f32.partialorder %v1048, inf
    %v1057 = vsel %vm1056, %v1048, %v1055
    %vm1058 = vcmp.eq.f32.partialorder %v1048, 0.0
    %v1059 = vand.u32 %v1048, 2147483648
    %v1060 = vsel %vm1058, %v1059, %v1057
    %v1061 = vmax.f32 %v1060, 1e-15
    %v1062 = vmax.f32 %v1061, 0.0
    %v1063 = vmin.f32 %v1062, 0.9999999
    %v1064 = vadd.f32 %v1063, 1.0
    %v1065 = vsub.f32 1.0, %v1063
    %v1066 = vrcp.pop %v1065
    %v1067 = vmul.f32 %v1065, %v1066
    %v1068 = vsub.f32 1.0, %v1067
    %v1069 = vmul.f32 %v1066, %v1068
    %v1070 = vadd.f32 %v1066, %v1069
    %vm1071 = vweird.f32 %v1065
    %vm1072 = vweird.f32 %v1066
    %vm1073 = vmor %vm1071, %vm1072
    %v1074 = vsel %vm1073, %v1066, %v1070
    %v1075 = vand.u32 2147483647, %v1065
    %vm1076 = vcmp.eq.f32.partialorder %v1075, 8.507059e+37
    %v1077 = vand.u32 %v1065, 2147483648
    %v1078 = vor.u32 1.1754944e-38, %v1077
    %v1079 = vsel %vm1076, %v1078, %v1074
    %v1080 = vmul.f32 %v1064, %v1079
    %v1081 = vlog2.pop %v1080
    %v1082 = vmul.f32 %v1081, 0.6931472
    %v1083 = vmul.f32 %v1082, 0.5
    %v1084 = vrcp.pop %v1061
    %v1085 = vmul.f32 %v1083, %v1084
    %v1087 = vsel %vm128, %v1044, 0
    %1089 = vmatpush.msra.mxu0 0.0
    %1090 = vmatpush.msra.mxu0 0.0
    %1091 = vmatpush.msra.mxu0 0.0
    %1092 = vmatpush.msra.mxu0 0.0
    %1093 = vmatpush.msra.mxu0 0.0
    %1094 = vmatpush.msra.mxu0 0.0
    %1095 = vmatpush.msra.mxu0 0.0
    %1096 = vmatpush.msra.mxu0 0.0
    %1097 = vmatpush.msra.mxu0 0.0
    %1098 = vmatpush.msra.mxu0 0.0
    %1099 = vmatpush.msra.mxu0 0.0
    %1100 = vmatpush.msra.mxu0 0.0
    %1101 = vmatpush.msra.mxu0 %v125
    %1102 = vmatpush.msra.mxu0 %v124
    %1103 = vmatpush.msra.mxu0 %v123
    %1104 = vmatpush.msra.mxu0 %v122
    %1105 = vmatmul.f32.gmra.mxu0 %v1087
    %v1106 = vpop.f32.mrf.mxu0
    %v1107 = vadd.f32 0.0, %v1106
    %1108 = vdwg.mxu0
    %v1109 = vmul.f32 %v1107, %v1107
    %v1110 = vsel %vm128, %v1109, 0.0
    %1111 = vadd.xlane.f32.xlu0 %v1110
    %v1112 = vpop.xlane.xlu0 %1111
    %v1113 = vrsqrt.pop %v1112
    %v1114 = vmul.f32 %v1113, %v1112
    %v1115 = vmul.f32 %v1114, %v1113
    %v1116 = vmul.f32 0.5, %v1115
    %v1117 = vsub.f32 1.5, %v1116
    %v1118 = vmul.f32 %v1113, %v1117
    %v1119 = vmul.f32 %v1112, %v1118
    %vm1120 = vcmp.eq.f32.partialorder %v1112, inf
    %v1121 = vsel %vm1120, %v1112, %v1119
    %vm1122 = vcmp.eq.f32.partialorder %v1112, 0.0
    %v1123 = vand.u32 %v1112, 2147483648
    %v1124 = vsel %vm1122, %v1123, %v1121
    %v1125 = vmax.f32 %v1124, 1e-15
    %v1126 = vmul.f32 %v1125, %v1085
    %v1127 = vmax.f32 %v1126, -15.0
    %v1128 = vmin.f32 %v1127, 15.0
    %v1129 = vtanh.pop %v1128
    %v1130 = vmul.f32 %v1129, %v1107
    %v1131 = vrcp.pop %v1125
    %v1132 = vmul.f32 %v1130, %v1131
    %v1133 = vmul.f32 %v1132, %v1132
    %v1134 = vsel %vm128, %v1133, 0.0
    %1135 = vadd.xlane.f32.xlu0 %v1134
    %v1136 = vpop.xlane.xlu0 %1135
    %v1137 = vrsqrt.pop %v1136
    %v1138 = vmul.f32 %v1137, %v1136
    %v1139 = vmul.f32 %v1138, %v1137
    %v1140 = vmul.f32 0.5, %v1139
    %v1141 = vsub.f32 1.5, %v1140
    %v1142 = vmul.f32 %v1137, %v1141
    %v1143 = vmul.f32 %v1136, %v1142
    %vm1144 = vcmp.eq.f32.partialorder %v1136, inf
    %v1145 = vsel %vm1144, %v1136, %v1143
    %vm1146 = vcmp.eq.f32.partialorder %v1136, 0.0
    %v1147 = vand.u32 %v1136, 2147483648
    %v1148 = vsel %vm1146, %v1147, %v1145
    %vm1149 = vcmp.gt.f32.partialorder %v1148, 0.99999
    %v1150 = vmax.f32 %v1148, 1e-15
    %v1151 = vrcp.pop %v1150
    %v1152 = vmul.f32 %v1151, 0.99999
    %v1153 = vsel %vm1149, %v1152, 1.0
    %v1154 = vmul.f32 %v1132, %v1153
    %1156 = vrot.lane.b32.xlu0 %v497, 96
    %v1157 = vpop.permute.xlu0 %1156
    %v1159 = vmul.f32 %v1154, %v1157
    %v1160 = vsel %vm128, %v1159, 0.0
    %1161 = vadd.xlane.f32.xlu0 %v1160
    %v1162 = vpop.xlane.xlu0 %1161
    %v1163 = vmul.f32 %v1154, %v1154
    %v1164 = vsel %vm128, %v1163, 0.0
    %1165 = vadd.xlane.f32.xlu0 %v1164
    %v1166 = vpop.xlane.xlu0 %1165
    %v1167 = vmul.f32 %v1162, 2.0
    %v1168 = vadd.f32 %v1167, 1.0
    %v1169 = vadd.f32 %v1168, %v732
    %v1170 = vmul.f32 %v1169, %v1154
    %v1171 = vsub.f32 1.0, %v1166
    %v1172 = vmul.f32 %v1171, %v497
    %1174 = vrot.lane.b32.xlu0 %v1172, 96
    %v1175 = vpop.permute.xlu0 %1174
    %v1177 = vadd.f32 %v1170, %v1175
    %v1178 = vmul.f32 %v1166, %v732
    %v1179 = vadd.f32 %v1168, %v1178
    %v1180 = vmax.f32 %v1179, 1e-15
    %v1181 = vrcp.pop %v1180
    %v1182 = vmul.f32 %v1177, %v1181
    %v1183 = vmul.f32 %v1182, %v1182
    %v1184 = vsel %vm128, %v1183, 0.0
    %1185 = vadd.xlane.f32.xlu0 %v1184
    %v1186 = vpop.xlane.xlu0 %1185
    %v1187 = vrsqrt.pop %v1186
    %v1188 = vmul.f32 %v1187, %v1186
    %v1189 = vmul.f32 %v1188, %v1187
    %v1190 = vmul.f32 0.5, %v1189
    %v1191 = vsub.f32 1.5, %v1190
    %v1192 = vmul.f32 %v1187, %v1191
    %v1193 = vmul.f32 %v1186, %v1192
    %vm1194 = vcmp.eq.f32.partialorder %v1186, inf
    %v1195 = vsel %vm1194, %v1186, %v1193
    %vm1196 = vcmp.eq.f32.partialorder %v1186, 0.0
    %v1197 = vand.u32 %v1186, 2147483648
    %v1198 = vsel %vm1196, %v1197, %v1195
    %vm1199 = vcmp.gt.f32.partialorder %v1198, 0.99999
    %v1200 = vmax.f32 %v1198, 1e-15
    %v1201 = vrcp.pop %v1200
    %v1202 = vmul.f32 %v1201, 0.99999
    %v1203 = vsel %vm1199, %v1202, 1.0
    %v1204 = vmul.f32 %v1182, %v1203
    %v1205 = vperm.slane %v126, 2
    %v1206 = vmul.f32 %v1204, %v1205
    %v1207 = vsel %vm128, %v1206, 0.0
    %1208 = vadd.xlane.f32.xlu0 %v1207
    %v1209 = vpop.xlane.xlu0 %1208
    %v1210 = vmul.f32 %v1204, %v1204
    %v1211 = vsel %vm128, %v1210, 0.0
    %1212 = vadd.xlane.f32.xlu0 %v1211
    %v1213 = vpop.xlane.xlu0 %1212
    %vm1214 = vcmask 256002
    %v1215 = vsel %vm1214, %v553, 0.0
    %1216 = vadd.xlane.f32.xlu0 %v1215
    %v1217 = vpop.xlane.xlu0 %1216
    %v1218 = vmul.f32 %v1209, 2.0
    %v1219 = vadd.f32 %v1218, 1.0
    %v1220 = vperm.slane %v1217, 2
    %v1221 = vadd.f32 %v1219, %v1220
    %v1222 = vmul.f32 %v1221, %v1204
    %v1223 = vsub.f32 1.0, %v1213
    %v1224 = vmul.f32 %v1223, %v1205
    %v1225 = vadd.f32 %v1222, %v1224
    %v1226 = vmul.f32 %v1213, %v1220
    %v1227 = vadd.f32 %v1219, %v1226
    %v1228 = vmax.f32 %v1227, 1e-15
    %v1229 = vrcp.pop %v1228
    %v1230 = vmul.f32 %v1225, %v1229
    %v1231 = vmul.f32 %v1230, %v1230
    %v1232 = vsel %vm128, %v1231, 0.0
    %1233 = vadd.xlane.f32.xlu0 %v1232
    %v1234 = vpop.xlane.xlu0 %1233
    %v1235 = vrsqrt.pop %v1234
    %v1236 = vmul.f32 %v1235, %v1234
    %v1237 = vmul.f32 %v1236, %v1235
    %v1238 = vmul.f32 0.5, %v1237
    %v1239 = vsub.f32 1.5, %v1238
    %v1240 = vmul.f32 %v1235, %v1239
    %v1241 = vmul.f32 %v1234, %v1240
    %vm1242 = vcmp.eq.f32.partialorder %v1234, inf
    %v1243 = vsel %vm1242, %v1234, %v1241
    %vm1244 = vcmp.eq.f32.partialorder %v1234, 0.0
    %v1245 = vand.u32 %v1234, 2147483648
    %v1246 = vsel %vm1244, %v1245, %v1243
    %vm1247 = vcmp.gt.f32.partialorder %v1246, 0.99999
    %v1248 = vmax.f32 %v1246, 1e-15
    %v1249 = vrcp.pop %v1248
    %v1250 = vmul.f32 %v1249, 0.99999
    %v1251 = vsel %vm1247, %v1250, 1.0
    %v1252 = vmul.f32 %v1230, %v1251
    %v1253 = vsub.f32 0.0, %v113
    %v1254 = vmul.f32 %v1253, %v1252
    %v1255 = vsel %vm128, %v1254, 0.0
    %1256 = vadd.xlane.f32.xlu0 %v1255
    %v1257 = vpop.xlane.xlu0 %1256
    %v1258 = vmul.f32 %v1253, %v1253
    %v1259 = vsel %vm128, %v1258, 0.0
    %1260 = vadd.xlane.f32.xlu0 %v1259
    %v1261 = vpop.xlane.xlu0 %1260
    %v1262 = vmul.f32 %v1252, %v1252
    %v1263 = vsel %vm128, %v1262, 0.0
    %1264 = vadd.xlane.f32.xlu0 %v1263
    %v1265 = vpop.xlane.xlu0 %1264
    %v1266 = vmul.f32 %v1257, 2.0
    %v1267 = vadd.f32 %v1266, 1.0
    %v1268 = vadd.f32 %v1267, %v1265
    %v1269 = vmul.f32 %v1268, %v1253
    %v1270 = vsub.f32 1.0, %v1261
    %v1271 = vmul.f32 %v1270, %v1252
    %v1272 = vadd.f32 %v1269, %v1271
    %v1273 = vmul.f32 %v1261, %v1265
    %v1274 = vadd.f32 %v1267, %v1273
    %v1275 = vmax.f32 %v1274, 1e-15
    %v1276 = vrcp.pop %v1275
    %v1277 = vmul.f32 %v1272, %v1276
    %v1278 = vmul.f32 %v1277, %v1277
    %v1279 = vsel %vm128, %v1278, 0.0
    %1280 = vadd.xlane.f32.xlu0 %v1279
    %v1281 = vpop.xlane.xlu0 %1280
    %v1282 = vrsqrt.pop %v1281
    %v1283 = vmul.f32 %v1282, %v1281
    %v1284 = vmul.f32 %v1283, %v1282
    %v1285 = vmul.f32 0.5, %v1284
    %v1286 = vsub.f32 1.5, %v1285
    %v1287 = vmul.f32 %v1282, %v1286
    %v1288 = vmul.f32 %v1281, %v1287
    %vm1289 = vcmp.eq.f32.partialorder %v1281, inf
    %v1290 = vsel %vm1289, %v1281, %v1288
    %vm1291 = vcmp.eq.f32.partialorder %v1281, 0.0
    %v1292 = vand.u32 %v1281, 2147483648
    %v1293 = vsel %vm1291, %v1292, %v1290
    %vm1294 = vcmp.gt.f32.partialorder %v1293, 0.99999
    %v1295 = vmax.f32 %v1293, 1e-15
    %v1296 = vrcp.pop %v1295
    %v1297 = vmul.f32 %v1296, 0.99999
    %v1298 = vsel %vm1294, %v1297, 1.0
    %v1299 = vmul.f32 %v1277, %v1298
    %v1300 = vmul.f32 %v1299, %v1299
    %v1301 = vsel %vm128, %v1300, 0.0
    %1302 = vadd.xlane.f32.xlu0 %v1301
    %v1303 = vpop.xlane.xlu0 %1302
    %v1304 = vrsqrt.pop %v1303
    %v1305 = vmul.f32 %v1304, %v1303
    %v1306 = vmul.f32 %v1305, %v1304
    %v1307 = vmul.f32 0.5, %v1306
    %v1308 = vsub.f32 1.5, %v1307
    %v1309 = vmul.f32 %v1304, %v1308
    %v1310 = vmul.f32 %v1303, %v1309
    %vm1311 = vcmp.eq.f32.partialorder %v1303, inf
    %v1312 = vsel %vm1311, %v1303, %v1310
    %vm1313 = vcmp.eq.f32.partialorder %v1303, 0.0
    %v1314 = vand.u32 %v1303, 2147483648
    %v1315 = vsel %vm1313, %v1314, %v1312
    %vm1316 = vcmp.gt.f32.partialorder %v1315, 0.99999
    %v1317 = vmax.f32 %v1315, 1e-15
    %v1318 = vrcp.pop %v1317
    %v1319 = vmul.f32 %v1318, 0.99999
    %v1320 = vsel %vm1316, %v1319, 1.0
    %v1321 = vmul.f32 %v1299, %v1320
    %v1322 = vmul.f32 %v1321, %v1321
    %v1323 = vsel %vm128, %v1322, 0.0
    %1324 = vadd.xlane.f32.xlu0 %v1323
    %v1325 = vpop.xlane.xlu0 %1324
    %v1326 = vrsqrt.pop %v1325
    %v1327 = vmul.f32 %v1326, %v1325
    %v1328 = vmul.f32 %v1327, %v1326
    %v1329 = vmul.f32 0.5, %v1328
    %v1330 = vsub.f32 1.5, %v1329
    %v1331 = vmul.f32 %v1326, %v1330
    %v1332 = vmul.f32 %v1325, %v1331
    %vm1333 = vcmp.eq.f32.partialorder %v1325, inf
    %v1334 = vsel %vm1333, %v1325, %v1332
    %vm1335 = vcmp.eq.f32.partialorder %v1325, 0.0
    %v1336 = vand.u32 %v1325, 2147483648
    %v1337 = vsel %vm1335, %v1336, %v1334
    %v1338 = vmax.f32 %v1337, 1e-15
    %v1339 = vmax.f32 %v1338, 0.0
    %v1340 = vmin.f32 %v1339, 0.9999999
    %v1341 = vadd.f32 %v1340, 1.0
    %v1342 = vsub.f32 1.0, %v1340
    %v1343 = vrcp.pop %v1342
    %v1344 = vmul.f32 %v1342, %v1343
    %v1345 = vsub.f32 1.0, %v1344
    %v1346 = vmul.f32 %v1343, %v1345
    %v1347 = vadd.f32 %v1343, %v1346
    %vm1348 = vweird.f32 %v1342
    %vm1349 = vweird.f32 %v1343
    %vm1350 = vmor %vm1348, %vm1349
    %v1351 = vsel %vm1350, %v1343, %v1347
    %v1352 = vand.u32 2147483647, %v1342
    %vm1353 = vcmp.eq.f32.partialorder %v1352, 8.507059e+37
    %v1354 = vand.u32 %v1342, 2147483648
    %v1355 = vor.u32 1.1754944e-38, %v1354
    %v1356 = vsel %vm1353, %v1355, %v1351
    %v1357 = vmul.f32 %v1341, %v1356
    %v1358 = vlog2.pop %v1357
    %v1359 = vmul.f32 %v1358, 0.6931472
    %v1360 = vmul.f32 %v1359, 0.5
    %v1361 = vrcp.pop %v1338
    %v1362 = vmul.f32 %v1360, %v1361
    %v1363 = vmul.f32 %v1321, %v708
    %v1364 = vmul.f32 %v1363, %v1363
    %v1365 = vsel %vm128, %v1364, 0.0
    %1366 = vadd.xlane.f32.xlu0 %v1365
    %v1367 = vpop.xlane.xlu0 %1366
    %v1368 = vrsqrt.pop %v1367
    %v1369 = vmul.f32 %v1368, %v1367
    %v1370 = vmul.f32 %v1369, %v1368
    %v1371 = vmul.f32 0.5, %v1370
    %v1372 = vsub.f32 1.5, %v1371
    %v1373 = vmul.f32 %v1368, %v1372
    %v1374 = vmul.f32 %v1367, %v1373
    %vm1375 = vcmp.eq.f32.partialorder %v1367, inf
    %v1376 = vsel %vm1375, %v1367, %v1374
    %vm1377 = vcmp.eq.f32.partialorder %v1367, 0.0
    %v1378 = vand.u32 %v1367, 2147483648
    %v1379 = vsel %vm1377, %v1378, %v1376
    %v1380 = vmax.f32 %v1379, 1e-15
    %v1381 = vmul.f32 %v1380, %v1362
    %v1382 = vmax.f32 %v1381, -15.0
    %v1383 = vmin.f32 %v1382, 15.0
    %v1384 = vtanh.pop %v1383
    %v1385 = vmul.f32 %v1384, %v1363
    %v1386 = vrcp.pop %v1380
    %v1387 = vmul.f32 %v1385, %v1386
    %v1388 = vmul.f32 %v1387, %v1387
    %v1389 = vsel %vm128, %v1388, 0.0
    %1390 = vadd.xlane.f32.xlu0 %v1389
    %v1391 = vpop.xlane.xlu0 %1390
    %v1392 = vrsqrt.pop %v1391
    %v1393 = vmul.f32 %v1392, %v1391
    %v1394 = vmul.f32 %v1393, %v1392
    %v1395 = vmul.f32 0.5, %v1394
    %v1396 = vsub.f32 1.5, %v1395
    %v1397 = vmul.f32 %v1392, %v1396
    %v1398 = vmul.f32 %v1391, %v1397
    %vm1399 = vcmp.eq.f32.partialorder %v1391, inf
    %v1400 = vsel %vm1399, %v1391, %v1398
    %vm1401 = vcmp.eq.f32.partialorder %v1391, 0.0
    %v1402 = vand.u32 %v1391, 2147483648
    %v1403 = vsel %vm1401, %v1402, %v1400
    %vm1404 = vcmp.gt.f32.partialorder %v1403, 0.99999
    %v1405 = vmax.f32 %v1403, 1e-15
    %v1406 = vrcp.pop %v1405
    %v1407 = vmul.f32 %v1406, 0.99999
    %v1408 = vsel %vm1404, %v1407, 1.0
    %v1409 = vmul.f32 %v1387, %v1408
    %v1410 = vmul.f32 %v113, %v1409
    %v1411 = vsel %vm128, %v1410, 0.0
    %1412 = vadd.xlane.f32.xlu0 %v1411
    %v1413 = vpop.xlane.xlu0 %1412
    %v1414 = vmul.f32 %v1409, %v1409
    %v1415 = vsel %vm128, %v1414, 0.0
    %1416 = vadd.xlane.f32.xlu0 %v1415
    %v1417 = vpop.xlane.xlu0 %1416
    %v1418 = vmul.f32 %v1413, 2.0
    %v1419 = vadd.f32 %v1418, 1.0
    %v1420 = vadd.f32 %v1419, %v1417
    %v1421 = vmul.f32 %v1420, %v113
    %v1422 = vsub.f32 1.0, %v194
    %v1423 = vmul.f32 %v1422, %v1409
    %v1424 = vadd.f32 %v1421, %v1423
    %v1425 = vmul.f32 %v194, %v1417
    %v1426 = vadd.f32 %v1419, %v1425
    %v1427 = vmax.f32 %v1426, 1e-15
    %v1428 = vrcp.pop %v1427
    %v1429 = vmul.f32 %v1424, %v1428
    %v1430 = vmul.f32 %v1429, %v1429
    %v1431 = vsel %vm128, %v1430, 0.0
    %1432 = vadd.xlane.f32.xlu0 %v1431
    %v1433 = vpop.xlane.xlu0 %1432
    %v1434 = vrsqrt.pop %v1433
    %v1435 = vmul.f32 %v1434, %v1433
    %v1436 = vmul.f32 %v1435, %v1434
    %v1437 = vmul.f32 0.5, %v1436
    %v1438 = vsub.f32 1.5, %v1437
    %v1439 = vmul.f32 %v1434, %v1438
    %v1440 = vmul.f32 %v1433, %v1439
    %vm1441 = vcmp.eq.f32.partialorder %v1433, inf
    %v1442 = vsel %vm1441, %v1433, %v1440
    %vm1443 = vcmp.eq.f32.partialorder %v1433, 0.0
    %v1444 = vand.u32 %v1433, 2147483648
    %v1445 = vsel %vm1443, %v1444, %v1442
    %vm1446 = vcmp.gt.f32.partialorder %v1445, 0.99999
    %v1447 = vmax.f32 %v1445, 1e-15
    %v1448 = vrcp.pop %v1447
    %v1449 = vmul.f32 %v1448, 0.99999
    %v1450 = vsel %vm1446, %v1449, 1.0
    %v1451 = vmul.f32 %v1429, %v1450
    %1452 = vst.msk [vmem:[#allocation13] sm:$0xff] %vm128, %v1451
    // Predicated region
    $region50: #{tpu_custom_call.1} parent=1 // pred_check
      _
    $region51: #{tpu_custom_call.1} parent=1 // pred_check_branch
      %1454 = sbr.rel (0) target = $region53
    $region52: #{tpu_custom_call.1} parent=1 // pred_region
      %1456 = vsyncadd [#allocation4], 0
      %s1458 = sshll.u32 [#allocation13], 4
      %s1459 = int_to_ptr.vmem [resolvable:$true] %s1458
      %s1460 = sshll.u32 %s6, 4
      %s1461 = int_to_ptr.hbm [resolvable:$true] %s1460
      %1463 = dma.vmem_to_hbm [thread:$0]  %s1459, 128, %s1461, [#allocation4]
    $region53: #{tpu_custom_call.1} parent=1 // pred_fallthru
      _
    // Predicated region
    $region54: #{tpu_custom_call.1} parent=1 // pred_check
      _
    $region55: #{tpu_custom_call.1} parent=1 // pred_check_branch
      %1465 = sbr.rel (0) target = $region57
    $region56: #{tpu_custom_call.1} parent=1 // pred_region
      %1467 = dma.done [#allocation4], 128
    $region57: #{tpu_custom_call.1} parent=1 // pred_fallthru
      _
    %1468 = vsyncpa [#allocation3], 1
    %1469 = vsyncpa [#allocation6], 1
    %1470 = vsyncpa [#allocation9], 1
    %1471 = vsyncpa [#allocation12], 1
    %1472 = vsyncpa [#allocation4], 1

</llo_original>
